<compile_context>
chip_gen: v7x
topology: tpu7x:2x2x1
jax: 0.10.0
libtpu: 0.0.40
codegen_flags: <defaults>
</compile_context>

<pallas_src>
import functools
import math

import jax
import jax.numpy as jnp
from jax.experimental import pallas as pl
from jax.experimental.pallas import tpu as pltpu

# Model hyper-params (hidden_dim, num_heads, num_actions from __init__; input_dim
# inferred from x.size(-1)).
INPUT_DIM = 16
HIDDEN = 32
NUM_HEADS = 4
HEAD_DIM = HIDDEN // NUM_HEADS
NUM_ACTIONS = 12
LN_EPS = 1e-5

# Lane-padded width of the fused action+value head output (lane-dense store).
OUT_PAD = 128

# Rows (flattened batch*seq) per grid step.  Attention is linear in rows now, so
# bigger blocks just amortize per-step overhead; VMEM footprint stays ~1-2 MiB.
TARGET_BLOCK_ROWS = 1024


def _layer_norm(x, gamma, beta):
    mean = jnp.mean(x, axis=-1, keepdims=True)
    var = jnp.mean((x - mean) ** 2, axis=-1, keepdims=True)
    return (x - mean) * jax.lax.rsqrt(var + LN_EPS) * gamma + beta


def cursor_head_kernel(x_ref, wp_ref, bp_ref, win_ref, bin_ref, wout_ref, bout_ref,
                       ln1g_ref, ln1b_ref, w1_ref, b1_ref, w2_ref, b2_ref,
                       ln2g_ref, ln2b_ref, wav_ref, bav_ref, out_ref,
                       *, seq_len, seqs):
    rows = seqs * seq_len

    x = x_ref[...]                                            # (rows, Din)
    x = jnp.where(jnp.isnan(x), jnp.zeros_like(x), x)

    # ---- input projection ----
    h = jnp.dot(x, wp_ref[...], preferred_element_type=jnp.float32) + bp_ref[...]

    # ---- fused QKV projection ----
    qkv = jnp.dot(h, win_ref[...], preferred_element_type=jnp.float32) + bin_ref[...]

    # ---- per-sequence, per-head batched attention (no cross-sequence mask needed)
    scale = 1.0 / math.sqrt(HEAD_DIM)
    head_outs = []
    for hi in range(NUM_HEADS):                               # static 4-way unroll
        lo = hi * HEAD_DIM
        qh = qkv[:, lo:lo + HEAD_DIM].reshape(seqs, seq_len, HEAD_DIM)
        kh = qkv[:, HIDDEN + lo:HIDDEN + lo + HEAD_DIM].reshape(seqs, seq_len, HEAD_DIM)
        vh = qkv[:, 2 * HIDDEN + lo:2 * HIDDEN + lo + HEAD_DIM].reshape(seqs, seq_len, HEAD_DIM)
        s = jnp.einsum('bqd,bkd->bqk', qh, kh,
                       preferred_element_type=jnp.float32) * scale   # (seqs, S, S)
        s = s - jnp.max(s, axis=-1, keepdims=True)
        p = jnp.exp(s)
        # exact divide (not approx reciprocal) to keep 1e-5 parity with the reference
        p = p / jnp.sum(p, axis=-1, keepdims=True)
        o = jnp.einsum('bqk,bkd->bqd', p, vh, preferred_element_type=jnp.float32)
        head_outs.append(o.reshape(rows, HEAD_DIM))
    attn = jnp.concatenate(head_outs, axis=-1)                # (rows, H)
    attn = jnp.dot(attn, wout_ref[...], preferred_element_type=jnp.float32) + bout_ref[...]

    h = _layer_norm(h + attn, ln1g_ref[...], ln1b_ref[...])

    # ---- feed forward ----
    ff = jnp.dot(h, w1_ref[...], preferred_element_type=jnp.float32) + b1_ref[...]
    ff = jnp.maximum(ff, 0.0)
    ff = jnp.dot(ff, w2_ref[...], preferred_element_type=jnp.float32) + b2_ref[...]
    h = _layer_norm(h + ff, ln2g_ref[...], ln2b_ref[...])

    # ---- fused, lane-padded action + value head: one matmul, one dense store ----
    av = jnp.dot(h, wav_ref[...], preferred_element_type=jnp.float32) + bav_ref[...]  # (rows, OUT_PAD)
    col = jax.lax.broadcasted_iota(jnp.int32, (rows, OUT_PAD), 1)
    act_mask = col < NUM_ACTIONS
    m = jnp.max(jnp.where(act_mask, av, -jnp.inf), axis=-1, keepdims=True)
    e = jnp.where(act_mask, jnp.exp(av - m), 0.0)
    denom = jnp.maximum(jnp.sum(e, axis=-1, keepdims=True), 1e-10)
    # action lanes -> probs, lane NUM_ACTIONS -> value, remaining padded lanes -> 0
    out_ref[...] = jnp.where(act_mask, e / denom, av)


def _seqs_per_block(B, S):
    """Pick sequences per grid step: big enough to amortize per-step cost, small
    enough to leave >=2 (ideally >=4) grid steps for v7x's two TensorCores."""
    if B >= 4:
        min_steps = 4
    elif B > 1:
        min_steps = 2
    else:
        min_steps = 1
    spb = min(max(1, B // min_steps), max(1, TARGET_BLOCK_ROWS // S))
    # grid must tile B exactly and the row block must obey the (8, .) sublane rule
    while spb > 1 and (B % spb != 0 or (spb * S) % 8 != 0):
        spb -= 1
    if (spb * S) % 8 != 0 and spb != B:
        spb = B            # full-extent block always satisfies the sublane rule
    return spb


def cursor_control_head(x, params):
    B, S, Din = x.shape
    assert Din == INPUT_DIM

    spb = _seqs_per_block(B, S)
    rows = spb * S
    grid = (B // spb,)
    x_flat = x.reshape(B * S, Din)

    # Fuse the action + value heads and zero-pad to 128 output lanes (lane-dense store).
    wav_pad = jnp.zeros((HIDDEN, OUT_PAD), jnp.float32)
    wav_pad = wav_pad.at[:, :NUM_ACTIONS].set(params["wa"])
    wav_pad = wav_pad.at[:, NUM_ACTIONS:NUM_ACTIONS + 1].set(params["wv"])
    bav_pad = jnp.zeros((1, OUT_PAD), jnp.float32)
    bav_pad = bav_pad.at[:, :NUM_ACTIONS].set(params["ba"])
    bav_pad = bav_pad.at[:, NUM_ACTIONS:NUM_ACTIONS + 1].set(params["bv"])

    weight_args = [
        params["wp"], params["bp"],
        params["win"], params["bin"], params["wout"], params["bout"],
        params["ln1g"], params["ln1b"],
        params["w1"], params["b1"], params["w2"], params["b2"],
        params["ln2g"], params["ln2b"],
        wav_pad, bav_pad,
    ]
    const_map = lambda i: (0, 0)   # fetched once; pipeline skips re-fetch of unchanged blocks

    in_specs = [pl.BlockSpec((rows, Din), lambda i: (i, 0))]
    in_specs += [pl.BlockSpec(w.shape, const_map) for w in weight_args]

    out_flat = pl.pallas_call(
        functools.partial(cursor_head_kernel, seq_len=S, seqs=spb),
        grid=grid,
        in_specs=in_specs,
        out_specs=pl.BlockSpec((rows, OUT_PAD), lambda i: (i, 0)),
        out_shape=jax.ShapeDtypeStruct((B * S, OUT_PAD), jnp.float32),
        # Grid steps are fully independent -> "parallel" lets v7x use both TCs.
        compiler_params=pltpu.CompilerParams(dimension_semantics=("parallel",)),
    )(x_flat, *weight_args)

    out = out_flat.reshape(B, S, OUT_PAD)
    return out[..., :NUM_ACTIONS], out[..., NUM_ACTIONS:NUM_ACTIONS + 1]


# ------------------------ deterministic parameter init ------------------------
def _xavier_normal(key, out_f, in_f, gain):
    std = gain * math.sqrt(2.0 / (in_f + out_f))
    return std * jax.random.normal(key, (out_f, in_f), jnp.float32)


def _torch_linear_default(key, out_f, in_f):
    bound = 1.0 / math.sqrt(in_f)
    return jax.random.uniform(key, (out_f, in_f), jnp.float32, -bound, bound)


def _torch_bias_default(key, out_f, in_f):
    bound = 1.0 / math.sqrt(in_f)
    return jax.random.uniform(key, (out_f,), jnp.float32, -bound, bound)


def make_params(key):
    ks = jax.random.split(key, 16)
    H, A, Din = HIDDEN, NUM_ACTIONS, INPUT_DIM
    p = {}
    # input_proj: xavier_normal(gain=0.01) weight, default bias
    p["wp"] = _xavier_normal(ks[0], H, Din, 0.01).T                       # (Din, H)
    p["bp"] = _torch_bias_default(ks[1], H, Din).reshape(1, H)
    # attention in_proj (3H, H) xavier_uniform-like, bias zeros (PyTorch MHA default)
    bound = math.sqrt(6.0 / (H + 3 * H))
    p["win"] = jax.random.uniform(ks[2], (3 * H, H), jnp.float32, -bound, bound).T   # (H, 3H)
    p["bin"] = jnp.zeros((1, 3 * H), jnp.float32)
    # attention out_proj
    p["wout"] = _torch_linear_default(ks[3], H, H).T                      # (H, H)
    p["bout"] = jnp.zeros((1, H), jnp.float32)
    # layer norms
    p["ln1g"] = jnp.ones((1, H), jnp.float32)
    p["ln1b"] = jnp.zeros((1, H), jnp.float32)
    p["ln2g"] = jnp.ones((1, H), jnp.float32)
    p["ln2b"] = jnp.zeros((1, H), jnp.float32)
    # feed forward
    p["w1"] = _torch_linear_default(ks[4], H, H).T
    p["b1"] = _torch_bias_default(ks[5], H, H).reshape(1, H)
    p["w2"] = _torch_linear_default(ks[6], H, H).T
    p["b2"] = _torch_bias_default(ks[7], H, H).reshape(1, H)
    # action head: xavier_normal(gain=0.01), default bias
    p["wa"] = _xavier_normal(ks[8], A, H, 0.01).T                         # (H, A)
    p["ba"] = _torch_bias_default(ks[9], A, H).reshape(1, A)
    # value head
    p["wv"] = _xavier_normal(ks[10], 1, H, 0.01).T                        # (H, 1)
    p["bv"] = _torch_bias_default(ks[11], 1, H).reshape(1, 1)
    return p


# ------------------------------ pure-JAX reference ----------------------------
def reference(x, p):
    def one(xb):
        xb = jnp.where(jnp.isnan(xb), 0.0, xb)
        h = xb @ p["wp"] + p["bp"]
        qkv = h @ p["win"] + p["bin"]
        q, k, v = qkv[:, :HIDDEN], qkv[:, HIDDEN:2 * HIDDEN], qkv[:, 2 * HIDDEN:]
        outs = []
        for hi in range(NUM_HEADS):
            sl = slice(hi * HEAD_DIM, (hi + 1) * HEAD_DIM)
            s = (q[:, sl] @ k[:, sl].T) / math.sqrt(HEAD_DIM)
            pr = jax.nn.softmax(s, axis=-1)
            outs.append(pr @ v[:, sl])
        attn = jnp.concatenate(outs, axis=-1) @ p["wout"] + p["bout"]
        h = _layer_norm(h + attn, p["ln1g"], p["ln1b"])
        ff = jnp.maximum(h @ p["w1"] + p["b1"], 0.0) @ p["w2"] + p["b2"]
        h = _layer_norm(h + ff, p["ln2g"], p["ln2b"])
        logits = h @ p["wa"] + p["ba"]
        logits = logits - jnp.max(logits, axis=-1, keepdims=True)
        e = jnp.exp(logits)
        probs = e / jnp.maximum(jnp.sum(e, axis=-1, keepdims=True), 1e-10)
        vals = h @ p["wv"] + p["bv"]
        return probs, vals
    return jax.vmap(one)(x)


if __name__ == "__main__":
    key = jax.random.PRNGKey(0)
    kx, kp = jax.random.split(key)
    B, S = 2, 8
    x = jax.random.normal(kx, (B, S, INPUT_DIM), jnp.float32)
    params = make_params(kp)

    probs, values = cursor_control_head(x, params)
    jax.block_until_ready((probs, values))

    probs_ref, values_ref = reference(x, params)
    assert probs.shape == (B, S, NUM_ACTIONS) and values.shape == (B, S, 1)
    assert jnp.allclose(probs, probs_ref, atol=1e-5, rtol=1e-5)
    assert jnp.allclose(values, values_ref, atol=1e-5, rtol=1e-5)
    assert jnp.allclose(jnp.sum(probs, axis=-1), 1.0, atol=1e-5)

    print("KERNEL_OK")
</pallas_src>

<mosaic_0001>
module attributes {stable_mosaic.version = 11 : i64} {
  func.func @cursor_head_kernel(%arg0: i32, %arg1: memref<8x16xf32, #tpu.memory_space<vmem>>, %arg2: memref<16x32xf32, #tpu.memory_space<vmem>>, %arg3: memref<1x32xf32, #tpu.memory_space<vmem>>, %arg4: memref<32x96xf32, #tpu.memory_space<vmem>>, %arg5: memref<1x96xf32, #tpu.memory_space<vmem>>, %arg6: memref<32x32xf32, #tpu.memory_space<vmem>>, %arg7: memref<1x32xf32, #tpu.memory_space<vmem>>, %arg8: memref<1x32xf32, #tpu.memory_space<vmem>>, %arg9: memref<1x32xf32, #tpu.memory_space<vmem>>, %arg10: memref<32x32xf32, #tpu.memory_space<vmem>>, %arg11: memref<1x32xf32, #tpu.memory_space<vmem>>, %arg12: memref<32x32xf32, #tpu.memory_space<vmem>>, %arg13: memref<1x32xf32, #tpu.memory_space<vmem>>, %arg14: memref<1x32xf32, #tpu.memory_space<vmem>>, %arg15: memref<1x32xf32, #tpu.memory_space<vmem>>, %arg16: memref<32x128xf32, #tpu.memory_space<vmem>>, %arg17: memref<1x128xf32, #tpu.memory_space<vmem>>, %arg18: memref<8x128xf32, #tpu.memory_space<vmem>>) attributes {dimension_semantics = [#tpu.dimension_semantics<parallel>], iteration_bounds = array<i64: 2>, scalar_prefetch = 0 : i64, scratch_operands = 0 : i64, tpu.core_type = #tpu.core_type<tc>, window_params = [{transform_indices = @transform_0, window_bounds = array<i64: 8, 16>}, {pipeline_mode = #tpu.pipeline_mode<synchronous>, transform_indices = @transform_1, window_bounds = array<i64: 16, 32>}, {pipeline_mode = #tpu.pipeline_mode<synchronous>, transform_indices = @transform_2, window_bounds = array<i64: 1, 32>}, {pipeline_mode = #tpu.pipeline_mode<synchronous>, transform_indices = @transform_3, window_bounds = array<i64: 32, 96>}, {pipeline_mode = #tpu.pipeline_mode<synchronous>, transform_indices = @transform_4, window_bounds = array<i64: 1, 96>}, {pipeline_mode = #tpu.pipeline_mode<synchronous>, transform_indices = @transform_5, window_bounds = array<i64: 32, 32>}, {pipeline_mode = #tpu.pipeline_mode<synchronous>, transform_indices = @transform_6, window_bounds = array<i64: 1, 32>}, {pipeline_mode = #tpu.pipeline_mode<synchronous>, transform_indices = @transform_7, window_bounds = array<i64: 1, 32>}, {pipeline_mode = #tpu.pipeline_mode<synchronous>, transform_indices = @transform_8, window_bounds = array<i64: 1, 32>}, {pipeline_mode = #tpu.pipeline_mode<synchronous>, transform_indices = @transform_9, window_bounds = array<i64: 32, 32>}, {pipeline_mode = #tpu.pipeline_mode<synchronous>, transform_indices = @transform_10, window_bounds = array<i64: 1, 32>}, {pipeline_mode = #tpu.pipeline_mode<synchronous>, transform_indices = @transform_11, window_bounds = array<i64: 32, 32>}, {pipeline_mode = #tpu.pipeline_mode<synchronous>, transform_indices = @transform_12, window_bounds = array<i64: 1, 32>}, {pipeline_mode = #tpu.pipeline_mode<synchronous>, transform_indices = @transform_13, window_bounds = array<i64: 1, 32>}, {pipeline_mode = #tpu.pipeline_mode<synchronous>, transform_indices = @transform_14, window_bounds = array<i64: 1, 32>}, {pipeline_mode = #tpu.pipeline_mode<synchronous>, transform_indices = @transform_15, window_bounds = array<i64: 32, 128>}, {pipeline_mode = #tpu.pipeline_mode<synchronous>, transform_indices = @transform_16, window_bounds = array<i64: 1, 128>}, {transform_indices = @transform_17, window_bounds = array<i64: 8, 128>}]} {
    %c0 = arith.constant 0 : index
    %c0_0 = arith.constant 0 : index
    %0 = vector.load %arg1[%c0, %c0_0] : memref<8x16xf32, #tpu.memory_space<vmem>>, vector<8x16xf32>
    %1 = arith.cmpf one, %0, %0 : vector<8x16xf32>
    %cst = arith.constant 0.000000e+00 : f32
    %2 = vector.broadcast %cst : f32 to vector<8x16xf32>
    %3 = arith.select %1, %2, %0 : vector<8x16xi1>, vector<8x16xf32>
    %c0_1 = arith.constant 0 : index
    %c0_2 = arith.constant 0 : index
    %4 = vector.load %arg2[%c0_1, %c0_2] : memref<16x32xf32, #tpu.memory_space<vmem>>, vector<16x32xf32>
    %cst_3 = arith.constant dense<0.000000e+00> : vector<8x32xf32>
    %5 = tpu.matmul %3, %4, %cst_3 {dimension_numbers = #tpu.dot_dimension_numbers<[1], [0], [0], [1], [0, 0, 1, 1], [], []>} : vector<8x16xf32>, vector<16x32xf32>, vector<8x32xf32> -> vector<8x32xf32>
    %c0_4 = arith.constant 0 : index
    %c0_5 = arith.constant 0 : index
    %6 = vector.load %arg3[%c0_4, %c0_5] : memref<1x32xf32, #tpu.memory_space<vmem>>, vector<1x32xf32>
    %7 = vector.broadcast %6 : vector<1x32xf32> to vector<8x32xf32>
    %8 = arith.addf %5, %7 : vector<8x32xf32>
    %c0_6 = arith.constant 0 : index
    %c0_7 = arith.constant 0 : index
    %9 = vector.load %arg4[%c0_6, %c0_7] : memref<32x96xf32, #tpu.memory_space<vmem>>, vector<32x96xf32>
    %cst_8 = arith.constant dense<0.000000e+00> : vector<8x96xf32>
    %10 = tpu.matmul %8, %9, %cst_8 {dimension_numbers = #tpu.dot_dimension_numbers<[1], [0], [0], [1], [0, 0, 1, 1], [], []>} : vector<8x32xf32>, vector<32x96xf32>, vector<8x96xf32> -> vector<8x96xf32>
    %c0_9 = arith.constant 0 : index
    %c0_10 = arith.constant 0 : index
    %11 = vector.load %arg5[%c0_9, %c0_10] : memref<1x96xf32, #tpu.memory_space<vmem>>, vector<1x96xf32>
    %12 = vector.broadcast %11 : vector<1x96xf32> to vector<8x96xf32>
    %13 = arith.addf %10, %12 : vector<8x96xf32>
    %14 = vector.extract_strided_slice %13 {offsets = [0, 0], sizes = [8, 8], strides = [1, 1]} : vector<8x96xf32> to vector<8x8xf32>
    %15 = vector.shape_cast %14 : vector<8x8xf32> to vector<1x8x8xf32>
    %16 = vector.extract_strided_slice %13 {offsets = [0, 32], sizes = [8, 8], strides = [1, 1]} : vector<8x96xf32> to vector<8x8xf32>
    %17 = vector.shape_cast %16 : vector<8x8xf32> to vector<1x8x8xf32>
    %18 = vector.extract_strided_slice %13 {offsets = [0, 64], sizes = [8, 8], strides = [1, 1]} : vector<8x96xf32> to vector<8x8xf32>
    %19 = vector.shape_cast %18 : vector<8x8xf32> to vector<1x8x8xf32>
    "tpu.trace_start"() <{level = 10 : i32, message = "bqd,bkd->bqk"}> : () -> ()
    %cst_11 = arith.constant dense<0.000000e+00> : vector<1x8x8xf32>
    %20 = tpu.matmul %15, %17, %cst_11 {dimension_numbers = #tpu.dot_dimension_numbers<[2], [2], [1], [1], [0, 0, 0, 1, 1, 1], [0], [0]>} : vector<1x8x8xf32>, vector<1x8x8xf32>, vector<1x8x8xf32> -> vector<1x8x8xf32>
    "tpu.trace_stop"() : () -> ()
    %cst_12 = arith.constant 0.353553385 : f32
    %21 = vector.broadcast %cst_12 : f32 to vector<1x8x8xf32>
    %22 = arith.mulf %20, %21 : vector<1x8x8xf32>
    %cst_13 = arith.constant dense<0xFF800000> : vector<1x8xf32>
    %23 = vector.multi_reduction <maximumf>, %22, %cst_13 [2] : vector<1x8x8xf32> to vector<1x8xf32>
    %24 = vector.shape_cast %23 : vector<1x8xf32> to vector<1x8x1xf32>
    %25 = vector.broadcast %24 : vector<1x8x1xf32> to vector<1x8x8xf32>
    %26 = arith.subf %22, %25 : vector<1x8x8xf32>
    %27 = math.exp %26 : vector<1x8x8xf32>
    %cst_14 = arith.constant dense<0.000000e+00> : vector<1x8xf32>
    %28 = vector.multi_reduction <add>, %27, %cst_14 [2] : vector<1x8x8xf32> to vector<1x8xf32>
    %29 = vector.shape_cast %28 : vector<1x8xf32> to vector<1x8x1xf32>
    %30 = vector.broadcast %29 : vector<1x8x1xf32> to vector<1x8x8xf32>
    %31 = arith.divf %27, %30 : vector<1x8x8xf32>
    "tpu.trace_start"() <{level = 10 : i32, message = "bqk,bkd->bqd"}> : () -> ()
    %cst_15 = arith.constant dense<0.000000e+00> : vector<1x8x8xf32>
    %32 = tpu.matmul %31, %19, %cst_15 {dimension_numbers = #tpu.dot_dimension_numbers<[2], [1], [1], [2], [0, 0, 0, 1, 1, 2], [0], [0]>} : vector<1x8x8xf32>, vector<1x8x8xf32>, vector<1x8x8xf32> -> vector<1x8x8xf32>
    "tpu.trace_stop"() : () -> ()
    %33 = vector.shape_cast %32 : vector<1x8x8xf32> to vector<8x8xf32>
    %34 = vector.extract_strided_slice %13 {offsets = [0, 8], sizes = [8, 8], strides = [1, 1]} : vector<8x96xf32> to vector<8x8xf32>
    %35 = vector.shape_cast %34 : vector<8x8xf32> to vector<1x8x8xf32>
    %36 = vector.extract_strided_slice %13 {offsets = [0, 40], sizes = [8, 8], strides = [1, 1]} : vector<8x96xf32> to vector<8x8xf32>
    %37 = vector.shape_cast %36 : vector<8x8xf32> to vector<1x8x8xf32>
    %38 = vector.extract_strided_slice %13 {offsets = [0, 72], sizes = [8, 8], strides = [1, 1]} : vector<8x96xf32> to vector<8x8xf32>
    %39 = vector.shape_cast %38 : vector<8x8xf32> to vector<1x8x8xf32>
    "tpu.trace_start"() <{level = 10 : i32, message = "bqd,bkd->bqk"}> : () -> ()
    %cst_16 = arith.constant dense<0.000000e+00> : vector<1x8x8xf32>
    %40 = tpu.matmul %35, %37, %cst_16 {dimension_numbers = #tpu.dot_dimension_numbers<[2], [2], [1], [1], [0, 0, 0, 1, 1, 1], [0], [0]>} : vector<1x8x8xf32>, vector<1x8x8xf32>, vector<1x8x8xf32> -> vector<1x8x8xf32>
    "tpu.trace_stop"() : () -> ()
    %cst_17 = arith.constant 0.353553385 : f32
    %41 = vector.broadcast %cst_17 : f32 to vector<1x8x8xf32>
    %42 = arith.mulf %40, %41 : vector<1x8x8xf32>
    %cst_18 = arith.constant dense<0xFF800000> : vector<1x8xf32>
    %43 = vector.multi_reduction <maximumf>, %42, %cst_18 [2] : vector<1x8x8xf32> to vector<1x8xf32>
    %44 = vector.shape_cast %43 : vector<1x8xf32> to vector<1x8x1xf32>
    %45 = vector.broadcast %44 : vector<1x8x1xf32> to vector<1x8x8xf32>
    %46 = arith.subf %42, %45 : vector<1x8x8xf32>
    %47 = math.exp %46 : vector<1x8x8xf32>
    %cst_19 = arith.constant dense<0.000000e+00> : vector<1x8xf32>
    %48 = vector.multi_reduction <add>, %47, %cst_19 [2] : vector<1x8x8xf32> to vector<1x8xf32>
    %49 = vector.shape_cast %48 : vector<1x8xf32> to vector<1x8x1xf32>
    %50 = vector.broadcast %49 : vector<1x8x1xf32> to vector<1x8x8xf32>
    %51 = arith.divf %47, %50 : vector<1x8x8xf32>
    "tpu.trace_start"() <{level = 10 : i32, message = "bqk,bkd->bqd"}> : () -> ()
    %cst_20 = arith.constant dense<0.000000e+00> : vector<1x8x8xf32>
    %52 = tpu.matmul %51, %39, %cst_20 {dimension_numbers = #tpu.dot_dimension_numbers<[2], [1], [1], [2], [0, 0, 0, 1, 1, 2], [0], [0]>} : vector<1x8x8xf32>, vector<1x8x8xf32>, vector<1x8x8xf32> -> vector<1x8x8xf32>
    "tpu.trace_stop"() : () -> ()
    %53 = vector.shape_cast %52 : vector<1x8x8xf32> to vector<8x8xf32>
    %54 = vector.extract_strided_slice %13 {offsets = [0, 16], sizes = [8, 8], strides = [1, 1]} : vector<8x96xf32> to vector<8x8xf32>
    %55 = vector.shape_cast %54 : vector<8x8xf32> to vector<1x8x8xf32>
    %56 = vector.extract_strided_slice %13 {offsets = [0, 48], sizes = [8, 8], strides = [1, 1]} : vector<8x96xf32> to vector<8x8xf32>
    %57 = vector.shape_cast %56 : vector<8x8xf32> to vector<1x8x8xf32>
    %58 = vector.extract_strided_slice %13 {offsets = [0, 80], sizes = [8, 8], strides = [1, 1]} : vector<8x96xf32> to vector<8x8xf32>
    %59 = vector.shape_cast %58 : vector<8x8xf32> to vector<1x8x8xf32>
    "tpu.trace_start"() <{level = 10 : i32, message = "bqd,bkd->bqk"}> : () -> ()
    %cst_21 = arith.constant dense<0.000000e+00> : vector<1x8x8xf32>
    %60 = tpu.matmul %55, %57, %cst_21 {dimension_numbers = #tpu.dot_dimension_numbers<[2], [2], [1], [1], [0, 0, 0, 1, 1, 1], [0], [0]>} : vector<1x8x8xf32>, vector<1x8x8xf32>, vector<1x8x8xf32> -> vector<1x8x8xf32>
    "tpu.trace_stop"() : () -> ()
    %cst_22 = arith.constant 0.353553385 : f32
    %61 = vector.broadcast %cst_22 : f32 to vector<1x8x8xf32>
    %62 = arith.mulf %60, %61 : vector<1x8x8xf32>
    %cst_23 = arith.constant dense<0xFF800000> : vector<1x8xf32>
    %63 = vector.multi_reduction <maximumf>, %62, %cst_23 [2] : vector<1x8x8xf32> to vector<1x8xf32>
    %64 = vector.shape_cast %63 : vector<1x8xf32> to vector<1x8x1xf32>
    %65 = vector.broadcast %64 : vector<1x8x1xf32> to vector<1x8x8xf32>
    %66 = arith.subf %62, %65 : vector<1x8x8xf32>
    %67 = math.exp %66 : vector<1x8x8xf32>
    %cst_24 = arith.constant dense<0.000000e+00> : vector<1x8xf32>
    %68 = vector.multi_reduction <add>, %67, %cst_24 [2] : vector<1x8x8xf32> to vector<1x8xf32>
    %69 = vector.shape_cast %68 : vector<1x8xf32> to vector<1x8x1xf32>
    %70 = vector.broadcast %69 : vector<1x8x1xf32> to vector<1x8x8xf32>
    %71 = arith.divf %67, %70 : vector<1x8x8xf32>
    "tpu.trace_start"() <{level = 10 : i32, message = "bqk,bkd->bqd"}> : () -> ()
    %cst_25 = arith.constant dense<0.000000e+00> : vector<1x8x8xf32>
    %72 = tpu.matmul %71, %59, %cst_25 {dimension_numbers = #tpu.dot_dimension_numbers<[2], [1], [1], [2], [0, 0, 0, 1, 1, 2], [0], [0]>} : vector<1x8x8xf32>, vector<1x8x8xf32>, vector<1x8x8xf32> -> vector<1x8x8xf32>
    "tpu.trace_stop"() : () -> ()
    %73 = vector.shape_cast %72 : vector<1x8x8xf32> to vector<8x8xf32>
    %74 = vector.extract_strided_slice %13 {offsets = [0, 24], sizes = [8, 8], strides = [1, 1]} : vector<8x96xf32> to vector<8x8xf32>
    %75 = vector.shape_cast %74 : vector<8x8xf32> to vector<1x8x8xf32>
    %76 = vector.extract_strided_slice %13 {offsets = [0, 56], sizes = [8, 8], strides = [1, 1]} : vector<8x96xf32> to vector<8x8xf32>
    %77 = vector.shape_cast %76 : vector<8x8xf32> to vector<1x8x8xf32>
    %78 = vector.extract_strided_slice %13 {offsets = [0, 88], sizes = [8, 8], strides = [1, 1]} : vector<8x96xf32> to vector<8x8xf32>
    %79 = vector.shape_cast %78 : vector<8x8xf32> to vector<1x8x8xf32>
    "tpu.trace_start"() <{level = 10 : i32, message = "bqd,bkd->bqk"}> : () -> ()
    %cst_26 = arith.constant dense<0.000000e+00> : vector<1x8x8xf32>
    %80 = tpu.matmul %75, %77, %cst_26 {dimension_numbers = #tpu.dot_dimension_numbers<[2], [2], [1], [1], [0, 0, 0, 1, 1, 1], [0], [0]>} : vector<1x8x8xf32>, vector<1x8x8xf32>, vector<1x8x8xf32> -> vector<1x8x8xf32>
    "tpu.trace_stop"() : () -> ()
    %cst_27 = arith.constant 0.353553385 : f32
    %81 = vector.broadcast %cst_27 : f32 to vector<1x8x8xf32>
    %82 = arith.mulf %80, %81 : vector<1x8x8xf32>
    %cst_28 = arith.constant dense<0xFF800000> : vector<1x8xf32>
    %83 = vector.multi_reduction <maximumf>, %82, %cst_28 [2] : vector<1x8x8xf32> to vector<1x8xf32>
    %84 = vector.shape_cast %83 : vector<1x8xf32> to vector<1x8x1xf32>
    %85 = vector.broadcast %84 : vector<1x8x1xf32> to vector<1x8x8xf32>
    %86 = arith.subf %82, %85 : vector<1x8x8xf32>
    %87 = math.exp %86 : vector<1x8x8xf32>
    %cst_29 = arith.constant dense<0.000000e+00> : vector<1x8xf32>
    %88 = vector.multi_reduction <add>, %87, %cst_29 [2] : vector<1x8x8xf32> to vector<1x8xf32>
    %89 = vector.shape_cast %88 : vector<1x8xf32> to vector<1x8x1xf32>
    %90 = vector.broadcast %89 : vector<1x8x1xf32> to vector<1x8x8xf32>
    %91 = arith.divf %87, %90 : vector<1x8x8xf32>
    "tpu.trace_start"() <{level = 10 : i32, message = "bqk,bkd->bqd"}> : () -> ()
    %cst_30 = arith.constant dense<0.000000e+00> : vector<1x8x8xf32>
    %92 = tpu.matmul %91, %79, %cst_30 {dimension_numbers = #tpu.dot_dimension_numbers<[2], [1], [1], [2], [0, 0, 0, 1, 1, 2], [0], [0]>} : vector<1x8x8xf32>, vector<1x8x8xf32>, vector<1x8x8xf32> -> vector<1x8x8xf32>
    "tpu.trace_stop"() : () -> ()
    %93 = vector.shape_cast %92 : vector<1x8x8xf32> to vector<8x8xf32>
    %94 = tpu.concatenate %33, %53, %73, %93 in 1 : vector<8x8xf32>, vector<8x8xf32>, vector<8x8xf32>, vector<8x8xf32> -> vector<8x32xf32>
    %c0_31 = arith.constant 0 : index
    %c0_32 = arith.constant 0 : index
    %95 = vector.load %arg6[%c0_31, %c0_32] : memref<32x32xf32, #tpu.memory_space<vmem>>, vector<32x32xf32>
    %cst_33 = arith.constant dense<0.000000e+00> : vector<8x32xf32>
    %96 = tpu.matmul %94, %95, %cst_33 {dimension_numbers = #tpu.dot_dimension_numbers<[1], [0], [0], [1], [0, 0, 1, 1], [], []>} : vector<8x32xf32>, vector<32x32xf32>, vector<8x32xf32> -> vector<8x32xf32>
    %c0_34 = arith.constant 0 : index
    %c0_35 = arith.constant 0 : index
    %97 = vector.load %arg7[%c0_34, %c0_35] : memref<1x32xf32, #tpu.memory_space<vmem>>, vector<1x32xf32>
    %98 = vector.broadcast %97 : vector<1x32xf32> to vector<8x32xf32>
    %99 = arith.addf %96, %98 : vector<8x32xf32>
    %100 = arith.addf %8, %99 : vector<8x32xf32>
    %c0_36 = arith.constant 0 : index
    %c0_37 = arith.constant 0 : index
    %101 = vector.load %arg8[%c0_36, %c0_37] : memref<1x32xf32, #tpu.memory_space<vmem>>, vector<1x32xf32>
    %c0_38 = arith.constant 0 : index
    %c0_39 = arith.constant 0 : index
    %102 = vector.load %arg9[%c0_38, %c0_39] : memref<1x32xf32, #tpu.memory_space<vmem>>, vector<1x32xf32>
    %cst_40 = arith.constant dense<0.000000e+00> : vector<8xf32>
    %103 = vector.multi_reduction <add>, %100, %cst_40 [1] : vector<8x32xf32> to vector<8xf32>
    %104 = vector.shape_cast %103 : vector<8xf32> to vector<8x1xf32>
    %cst_41 = arith.constant 3.200000e+01 : f32
    %105 = vector.broadcast %cst_41 : f32 to vector<8x1xf32>
    %106 = arith.divf %104, %105 : vector<8x1xf32>
    %107 = vector.broadcast %106 : vector<8x1xf32> to vector<8x32xf32>
    %108 = arith.subf %100, %107 : vector<8x32xf32>
    %109 = arith.mulf %108, %108 : vector<8x32xf32>
    %cst_42 = arith.constant dense<0.000000e+00> : vector<8xf32>
    %110 = vector.multi_reduction <add>, %109, %cst_42 [1] : vector<8x32xf32> to vector<8xf32>
    %111 = vector.shape_cast %110 : vector<8xf32> to vector<8x1xf32>
    %cst_43 = arith.constant 3.200000e+01 : f32
    %112 = vector.broadcast %cst_43 : f32 to vector<8x1xf32>
    %113 = arith.divf %111, %112 : vector<8x1xf32>
    %114 = vector.broadcast %106 : vector<8x1xf32> to vector<8x32xf32>
    %115 = arith.subf %100, %114 : vector<8x32xf32>
    %cst_44 = arith.constant 9.99999974E-6 : f32
    %116 = vector.broadcast %cst_44 : f32 to vector<8x1xf32>
    %117 = arith.addf %113, %116 : vector<8x1xf32>
    %118 = math.rsqrt %117 : vector<8x1xf32>
    %119 = vector.broadcast %118 : vector<8x1xf32> to vector<8x32xf32>
    %120 = arith.mulf %115, %119 : vector<8x32xf32>
    %121 = vector.broadcast %101 : vector<1x32xf32> to vector<8x32xf32>
    %122 = arith.mulf %120, %121 : vector<8x32xf32>
    %123 = vector.broadcast %102 : vector<1x32xf32> to vector<8x32xf32>
    %124 = arith.addf %122, %123 : vector<8x32xf32>
    %c0_45 = arith.constant 0 : index
    %c0_46 = arith.constant 0 : index
    %125 = vector.load %arg10[%c0_45, %c0_46] : memref<32x32xf32, #tpu.memory_space<vmem>>, vector<32x32xf32>
    %cst_47 = arith.constant dense<0.000000e+00> : vector<8x32xf32>
    %126 = tpu.matmul %124, %125, %cst_47 {dimension_numbers = #tpu.dot_dimension_numbers<[1], [0], [0], [1], [0, 0, 1, 1], [], []>} : vector<8x32xf32>, vector<32x32xf32>, vector<8x32xf32> -> vector<8x32xf32>
    %c0_48 = arith.constant 0 : index
    %c0_49 = arith.constant 0 : index
    %127 = vector.load %arg11[%c0_48, %c0_49] : memref<1x32xf32, #tpu.memory_space<vmem>>, vector<1x32xf32>
    %128 = vector.broadcast %127 : vector<1x32xf32> to vector<8x32xf32>
    %129 = arith.addf %126, %128 : vector<8x32xf32>
    %cst_50 = arith.constant 0.000000e+00 : f32
    %130 = vector.broadcast %cst_50 : f32 to vector<8x32xf32>
    %131 = arith.maximumf %129, %130 : vector<8x32xf32>
    %c0_51 = arith.constant 0 : index
    %c0_52 = arith.constant 0 : index
    %132 = vector.load %arg12[%c0_51, %c0_52] : memref<32x32xf32, #tpu.memory_space<vmem>>, vector<32x32xf32>
    %cst_53 = arith.constant dense<0.000000e+00> : vector<8x32xf32>
    %133 = tpu.matmul %131, %132, %cst_53 {dimension_numbers = #tpu.dot_dimension_numbers<[1], [0], [0], [1], [0, 0, 1, 1], [], []>} : vector<8x32xf32>, vector<32x32xf32>, vector<8x32xf32> -> vector<8x32xf32>
    %c0_54 = arith.constant 0 : index
    %c0_55 = arith.constant 0 : index
    %134 = vector.load %arg13[%c0_54, %c0_55] : memref<1x32xf32, #tpu.memory_space<vmem>>, vector<1x32xf32>
    %135 = vector.broadcast %134 : vector<1x32xf32> to vector<8x32xf32>
    %136 = arith.addf %133, %135 : vector<8x32xf32>
    %137 = arith.addf %124, %136 : vector<8x32xf32>
    %c0_56 = arith.constant 0 : index
    %c0_57 = arith.constant 0 : index
    %138 = vector.load %arg14[%c0_56, %c0_57] : memref<1x32xf32, #tpu.memory_space<vmem>>, vector<1x32xf32>
    %c0_58 = arith.constant 0 : index
    %c0_59 = arith.constant 0 : index
    %139 = vector.load %arg15[%c0_58, %c0_59] : memref<1x32xf32, #tpu.memory_space<vmem>>, vector<1x32xf32>
    %cst_60 = arith.constant dense<0.000000e+00> : vector<8xf32>
    %140 = vector.multi_reduction <add>, %137, %cst_60 [1] : vector<8x32xf32> to vector<8xf32>
    %141 = vector.shape_cast %140 : vector<8xf32> to vector<8x1xf32>
    %cst_61 = arith.constant 3.200000e+01 : f32
    %142 = vector.broadcast %cst_61 : f32 to vector<8x1xf32>
    %143 = arith.divf %141, %142 : vector<8x1xf32>
    %144 = vector.broadcast %143 : vector<8x1xf32> to vector<8x32xf32>
    %145 = arith.subf %137, %144 : vector<8x32xf32>
    %146 = arith.mulf %145, %145 : vector<8x32xf32>
    %cst_62 = arith.constant dense<0.000000e+00> : vector<8xf32>
    %147 = vector.multi_reduction <add>, %146, %cst_62 [1] : vector<8x32xf32> to vector<8xf32>
    %148 = vector.shape_cast %147 : vector<8xf32> to vector<8x1xf32>
    %cst_63 = arith.constant 3.200000e+01 : f32
    %149 = vector.broadcast %cst_63 : f32 to vector<8x1xf32>
    %150 = arith.divf %148, %149 : vector<8x1xf32>
    %151 = vector.broadcast %143 : vector<8x1xf32> to vector<8x32xf32>
    %152 = arith.subf %137, %151 : vector<8x32xf32>
    %cst_64 = arith.constant 9.99999974E-6 : f32
    %153 = vector.broadcast %cst_64 : f32 to vector<8x1xf32>
    %154 = arith.addf %150, %153 : vector<8x1xf32>
    %155 = math.rsqrt %154 : vector<8x1xf32>
    %156 = vector.broadcast %155 : vector<8x1xf32> to vector<8x32xf32>
    %157 = arith.mulf %152, %156 : vector<8x32xf32>
    %158 = vector.broadcast %138 : vector<1x32xf32> to vector<8x32xf32>
    %159 = arith.mulf %157, %158 : vector<8x32xf32>
    %160 = vector.broadcast %139 : vector<1x32xf32> to vector<8x32xf32>
    %161 = arith.addf %159, %160 : vector<8x32xf32>
    %c0_65 = arith.constant 0 : index
    %c0_66 = arith.constant 0 : index
    %162 = vector.load %arg16[%c0_65, %c0_66] : memref<32x128xf32, #tpu.memory_space<vmem>>, vector<32x128xf32>
    %cst_67 = arith.constant dense<0.000000e+00> : vector<8x128xf32>
    %163 = tpu.matmul %161, %162, %cst_67 {dimension_numbers = #tpu.dot_dimension_numbers<[1], [0], [0], [1], [0, 0, 1, 1], [], []>} : vector<8x32xf32>, vector<32x128xf32>, vector<8x128xf32> -> vector<8x128xf32>
    %c0_68 = arith.constant 0 : index
    %c0_69 = arith.constant 0 : index
    %164 = vector.load %arg17[%c0_68, %c0_69] : memref<1x128xf32, #tpu.memory_space<vmem>>, vector<1x128xf32>
    %165 = vector.broadcast %164 : vector<1x128xf32> to vector<8x128xf32>
    %166 = arith.addf %163, %165 : vector<8x128xf32>
    %167 = tpu.iota {dimensions = array<i32: 1>} : vector<8x128xi32>
    %c12_i32 = arith.constant 12 : i32
    %168 = vector.broadcast %c12_i32 : i32 to vector<8x128xi32>
    %169 = arith.cmpi slt, %167, %168 : vector<8x128xi32>
    %cst_70 = arith.constant 0xFF800000 : f32
    %170 = vector.broadcast %cst_70 : f32 to vector<8x128xf32>
    %171 = arith.select %169, %166, %170 : vector<8x128xi1>, vector<8x128xf32>
    %cst_71 = arith.constant dense<0xFF800000> : vector<8xf32>
    %172 = vector.multi_reduction <maximumf>, %171, %cst_71 [1] : vector<8x128xf32> to vector<8xf32>
    %173 = vector.shape_cast %172 : vector<8xf32> to vector<8x1xf32>
    %174 = vector.broadcast %173 : vector<8x1xf32> to vector<8x128xf32>
    %175 = arith.subf %166, %174 : vector<8x128xf32>
    %176 = math.exp %175 : vector<8x128xf32>
    %cst_72 = arith.constant 0.000000e+00 : f32
    %177 = vector.broadcast %cst_72 : f32 to vector<8x128xf32>
    %178 = arith.select %169, %176, %177 : vector<8x128xi1>, vector<8x128xf32>
    %cst_73 = arith.constant dense<0.000000e+00> : vector<8xf32>
    %179 = vector.multi_reduction <add>, %178, %cst_73 [1] : vector<8x128xf32> to vector<8xf32>
    %180 = vector.shape_cast %179 : vector<8xf32> to vector<8x1xf32>
    %cst_74 = arith.constant 1.000000e-10 : f32
    %181 = vector.broadcast %cst_74 : f32 to vector<8x1xf32>
    %182 = arith.maximumf %180, %181 : vector<8x1xf32>
    %183 = vector.broadcast %182 : vector<8x1xf32> to vector<8x128xf32>
    %184 = arith.divf %178, %183 : vector<8x128xf32>
    %185 = arith.select %169, %184, %166 : vector<8x128xi1>, vector<8x128xf32>
    %c0_75 = arith.constant 0 : index
    %c0_76 = arith.constant 0 : index
    %186 = vector.load %arg18[%c0_75, %c0_76] : memref<8x128xf32, #tpu.memory_space<vmem>>, vector<8x128xf32>
    tpu.vector_store %arg18[%c0_75, %c0_76], %185 {strides = array<i32>} : memref<8x128xf32, #tpu.memory_space<vmem>>, vector<8x128xf32>,
    return
  }
  func.func @transform_0(%arg0: i32) -> (i32, i32) {
    %c0_i32 = arith.constant 0 : i32
    %c0_i32_0 = arith.constant 0 : i32
    return %arg0, %c0_i32 : i32, i32
  }
  func.func @transform_1(%arg0: i32) -> (i32, i32) {
    %c0_i32 = arith.constant 0 : i32
    %c0_i32_0 = arith.constant 0 : i32
    %c0_i32_1 = arith.constant 0 : i32
    return %c0_i32, %c0_i32_0 : i32, i32
  }
  func.func @transform_2(%arg0: i32) -> (i32, i32) {
    %c0_i32 = arith.constant 0 : i32
    %c0_i32_0 = arith.constant 0 : i32
    %c0_i32_1 = arith.constant 0 : i32
    return %c0_i32, %c0_i32_0 : i32, i32
  }
  func.func @transform_3(%arg0: i32) -> (i32, i32) {
    %c0_i32 = arith.constant 0 : i32
    %c0_i32_0 = arith.constant 0 : i32
    %c0_i32_1 = arith.constant 0 : i32
    return %c0_i32, %c0_i32_0 : i32, i32
  }
  func.func @transform_4(%arg0: i32) -> (i32, i32) {
    %c0_i32 = arith.constant 0 : i32
    %c0_i32_0 = arith.constant 0 : i32
    %c0_i32_1 = arith.constant 0 : i32
    return %c0_i32, %c0_i32_0 : i32, i32
  }
  func.func @transform_5(%arg0: i32) -> (i32, i32) {
    %c0_i32 = arith.constant 0 : i32
    %c0_i32_0 = arith.constant 0 : i32
    %c0_i32_1 = arith.constant 0 : i32
    return %c0_i32, %c0_i32_0 : i32, i32
  }
  func.func @transform_6(%arg0: i32) -> (i32, i32) {
    %c0_i32 = arith.constant 0 : i32
    %c0_i32_0 = arith.constant 0 : i32
    %c0_i32_1 = arith.constant 0 : i32
    return %c0_i32, %c0_i32_0 : i32, i32
  }
  func.func @transform_7(%arg0: i32) -> (i32, i32) {
    %c0_i32 = arith.constant 0 : i32
    %c0_i32_0 = arith.constant 0 : i32
    %c0_i32_1 = arith.constant 0 : i32
    return %c0_i32, %c0_i32_0 : i32, i32
  }
  func.func @transform_8(%arg0: i32) -> (i32, i32) {
    %c0_i32 = arith.constant 0 : i32
    %c0_i32_0 = arith.constant 0 : i32
    %c0_i32_1 = arith.constant 0 : i32
    return %c0_i32, %c0_i32_0 : i32, i32
  }
  func.func @transform_9(%arg0: i32) -> (i32, i32) {
    %c0_i32 = arith.constant 0 : i32
    %c0_i32_0 = arith.constant 0 : i32
    %c0_i32_1 = arith.constant 0 : i32
    return %c0_i32, %c0_i32_0 : i32, i32
  }
  func.func @transform_10(%arg0: i32) -> (i32, i32) {
    %c0_i32 = arith.constant 0 : i32
    %c0_i32_0 = arith.constant 0 : i32
    %c0_i32_1 = arith.constant 0 : i32
    return %c0_i32, %c0_i32_0 : i32, i32
  }
  func.func @transform_11(%arg0: i32) -> (i32, i32) {
    %c0_i32 = arith.constant 0 : i32
    %c0_i32_0 = arith.constant 0 : i32
    %c0_i32_1 = arith.constant 0 : i32
    return %c0_i32, %c0_i32_0 : i32, i32
  }
  func.func @transform_12(%arg0: i32) -> (i32, i32) {
    %c0_i32 = arith.constant 0 : i32
    %c0_i32_0 = arith.constant 0 : i32
    %c0_i32_1 = arith.constant 0 : i32
    return %c0_i32, %c0_i32_0 : i32, i32
  }
  func.func @transform_13(%arg0: i32) -> (i32, i32) {
    %c0_i32 = arith.constant 0 : i32
    %c0_i32_0 = arith.constant 0 : i32
    %c0_i32_1 = arith.constant 0 : i32
    return %c0_i32, %c0_i32_0 : i32, i32
  }
  func.func @transform_14(%arg0: i32) -> (i32, i32) {
    %c0_i32 = arith.constant 0 : i32
    %c0_i32_0 = arith.constant 0 : i32
    %c0_i32_1 = arith.constant 0 : i32
    return %c0_i32, %c0_i32_0 : i32, i32
  }
  func.func @transform_15(%arg0: i32) -> (i32, i32) {
    %c0_i32 = arith.constant 0 : i32
    %c0_i32_0 = arith.constant 0 : i32
    %c0_i32_1 = arith.constant 0 : i32
    return %c0_i32, %c0_i32_0 : i32, i32
  }
  func.func @transform_16(%arg0: i32) -> (i32, i32) {
    %c0_i32 = arith.constant 0 : i32
    %c0_i32_0 = arith.constant 0 : i32
    %c0_i32_1 = arith.constant 0 : i32
    return %c0_i32, %c0_i32_0 : i32, i32
  }
  func.func @transform_17(%arg0: i32) -> (i32, i32) {
    %c0_i32 = arith.constant 0 : i32
    %c0_i32_0 = arith.constant 0 : i32
    return %arg0, %c0_i32 : i32, i32
  }
}

</mosaic_0001>

<llo_original>
// kernel: tpu_custom_call.1
$region0: #{tpu_custom_call.1}
  #allocation0 [shape = 'u32[]', space=smem, size = 0x4, offset = 0x4, fixed_abs, tag = 'smem constant byte address 0x4 - core index']
  #allocation1 [shape = 'u32[144,128]{1,0:T(1,128)}', space=vmem, size = 0x12000, scoped, tag = 'internal scratch']
  %s0 = inlined_call_operand.hbm [shape: f32[16,16], index: 0, kind: input, shape index: {}]
  %s1 = inlined_call_operand.hbm [shape: f32[16,32], index: 1, kind: input, shape index: {}]
  %s2 = inlined_call_operand.vmem [shape: f32[1,32], index: 2, kind: input, shape index: {}]
  %s3 = inlined_call_operand.hbm [shape: f32[32,96], index: 3, kind: input, shape index: {}]
  %s4 = inlined_call_operand.vmem [shape: f32[1,96], index: 4, kind: input, shape index: {}]
  %s5 = inlined_call_operand.hbm [shape: f32[32,32], index: 5, kind: input, shape index: {}]
  %s6 = inlined_call_operand.hbm [shape: f32[1,32], index: 6, kind: input, shape index: {}]
  %s7 = inlined_call_operand.hbm [shape: f32[1,32], index: 7, kind: input, shape index: {}]
  %s8 = inlined_call_operand.hbm [shape: f32[1,32], index: 8, kind: input, shape index: {}]
  %s9 = inlined_call_operand.vmem [shape: f32[32,32], index: 9, kind: input, shape index: {}]
  %s10 = inlined_call_operand.vmem [shape: f32[1,32], index: 10, kind: input, shape index: {}]
  %s11 = inlined_call_operand.hbm [shape: f32[32,32], index: 11, kind: input, shape index: {}]
  %s12 = inlined_call_operand.vmem [shape: f32[1,32], index: 12, kind: input, shape index: {}]
  %s13 = inlined_call_operand.vmem [shape: f32[1,32], index: 13, kind: input, shape index: {}]
  %s14 = inlined_call_operand.vmem [shape: f32[1,32], index: 14, kind: input, shape index: {}]
  %s15 = inlined_call_operand.hbm [shape: f32[32,128], index: 15, kind: input, shape index: {}]
  %s16 = inlined_call_operand.vmem [shape: f32[1,128], index: 16, kind: input, shape index: {}]
  %s17 = inlined_call_operand.hbm [shape: f32[16,128], index: 17, kind: output, shape index: {}]
  %s18 = sld [smem:[#allocation0]]
  $region137: #{tpu_custom_call.1} parent=0
    _
  %s20 = ssub.s32 1, %s18
  %s21 = scalar_select 0, %s20, %s18
  $region1: #{tpu_custom_call.1} parent=0
    #allocation2 [shape = 'u8[8192]{0}', space=vmem, size = 0x2000, scoped, tag = 'input window, operand 0']
    #allocation3 [shape = 's32[2]{0}', space=sflag, size = 0x8, scoped, tag = 'scoped memory for tpu_custom_call.1']
    #allocation4 [shape = 's32[2]{0}', space=sflag, size = 0x8, scoped, tag = 'scoped memory for tpu_custom_call.1']
    #allocation5 [shape = 'u8[8192]{0}', space=vmem, size = 0x2000, scoped, tag = 'input window, operand 1, single buffered']
    #allocation6 [shape = 's32[1]{0}', space=sflag, size = 0x4, scoped, tag = 'scoped memory for tpu_custom_call.1']
    #allocation7 [shape = 'u8[16384]{0}', space=vmem, size = 0x4000, scoped, tag = 'input window, operand 3, single buffered']
    #allocation8 [shape = 'u8[16384]{0}', space=vmem, size = 0x4000, scoped, tag = 'input window, operand 5, single buffered']
    #allocation9 [shape = 's32[1]{0}', space=sflag, size = 0x4, scoped, tag = 'scoped memory for tpu_custom_call.1']
    #allocation10 [shape = 'u8[512]{0}', space=vmem, size = 0x400, scoped, tag = 'input window, operand 6, single buffered']
    #allocation11 [shape = 'u8[512]{0}', space=vmem, size = 0x400, scoped, tag = 'input window, operand 7, single buffered']
    #allocation12 [shape = 's32[1]{0}', space=sflag, size = 0x4, scoped, tag = 'scoped memory for tpu_custom_call.1']
    #allocation13 [shape = 'u8[512]{0}', space=vmem, size = 0x400, scoped, tag = 'input window, operand 8, single buffered']
    #allocation14 [shape = 'u8[16384]{0}', space=vmem, size = 0x4000, scoped, tag = 'input window, operand 11, single buffered']
    #allocation15 [shape = 's32[1]{0}', space=sflag, size = 0x4, scoped, tag = 'scoped memory for tpu_custom_call.1']
    #allocation16 [shape = 'u8[16384]{0}', space=vmem, size = 0x4000, scoped, tag = 'input window, operand 15, single buffered']
    #allocation17 [shape = 'u8[8192]{0}', space=vmem, size = 0x2000, scoped, tag = 'output window, operand 0']
    %22 = vsyncpa [#allocation3], 0
    %s23 = scalar_lea.sflag [#allocation3], 1
    %24 = vsyncpa %s23, 0
    %25 = vsyncpa [#allocation6], 0
    %26 = vsyncpa [#allocation9], 0
    %27 = vsyncpa [#allocation12], 0
    %28 = vsyncpa [#allocation15], 0
    %29 = vsyncpa [#allocation4], 0
    %s30 = scalar_lea.sflag [#allocation4], 1
    %31 = vsyncpa %s30, 0
    loop: start=0, step=1, limit=4
    $region2: #{tpu_custom_call.1} parent=1 // loop_pre_header
      _
    $region3: #{tpu_custom_call.1} parent=1 // loop_header
      %s33 = sphi 0, %s37
      %p34 = scmp.ge.s32.totalorder %s33, 4
      %s43 = sphi 0, %s45
      %s46 = sphi 0, %s43
      %s47 = sphi 0, %s46
      %s63 = sphi 0, %s47
      %s67 = sphi 0, %s67
      %s69 = sphi 0, %s67
      %s70 = sphi 0, %s69
      %s84 = sphi 0, %s70
      %s88 = sphi 0, %s88
      %s90 = sphi 0, %s88
      %s91 = sphi 0, %s90
      %s105 = sphi 0, %s91
      %s109 = sphi 0, %s109
      %s111 = sphi 0, %s109
      %s112 = sphi 0, %s111
      %s126 = sphi 0, %s112
      %s130 = sphi 0, %s130
      %s132 = sphi 0, %s130
      %s133 = sphi 0, %s132
      %s147 = sphi 0, %s133
      %s151 = sphi 0, %s151
      %s153 = sphi 0, %s151
      %s154 = sphi 0, %s153
      %s168 = sphi 0, %s154
      %s172 = sphi 0, %s172
      %s174 = sphi 0, %s172
      %s175 = sphi 0, %s174
      %s189 = sphi 0, %s175
      %s193 = sphi 0, %s193
      %s195 = sphi 0, %s193
      %s196 = sphi 0, %s195
      %s210 = sphi 0, %s196
      %s214 = sphi 0, %s214
      %s216 = sphi 0, %s214
      %s217 = sphi 0, %s216
      %s231 = sphi 0, %s217
      %s235 = sphi 0, %s235
      %s237 = sphi 0, %s235
      %s238 = sphi 0, %s237
      %s252 = sphi 0, %s238
      %s256 = sphi 0, %s256
      %s258 = sphi 0, %s256
      %s259 = sphi 0, %s258
      %s273 = sphi 0, %s259
      %s277 = sphi 0, %s277
      %s279 = sphi 0, %s277
      %s280 = sphi 0, %s279
      %s294 = sphi 0, %s280
      %s298 = sphi 0, %s298
      %s300 = sphi 0, %s298
      %s301 = sphi 0, %s300
      %s315 = sphi 0, %s301
      %s319 = sphi 0, %s319
      %s321 = sphi 0, %s319
      %s322 = sphi 0, %s321
      %s336 = sphi 0, %s322
      %s340 = sphi 0, %s340
      %s342 = sphi 0, %s340
      %s343 = sphi 0, %s342
      %s357 = sphi 0, %s343
      %s361 = sphi 0, %s361
      %s363 = sphi 0, %s361
      %s364 = sphi 0, %s363
      %s378 = sphi 0, %s364
      %s382 = sphi 0, %s382
      %s384 = sphi 0, %s382
      %s385 = sphi 0, %s384
      %s399 = sphi 0, %s385
      %s405 = sphi 0, %s407
      %s408 = sphi 0, %s405
      %s409 = sphi 0, %s408
      %s425 = sphi 0, %s409
    $region4: #{tpu_custom_call.1} parent=1 // loop_header_branch
      %36 = sbr.rel (%p34) target = $region8
    $region5: #{tpu_custom_call.1} parent=1 // loop_body
      %s38 = ssub.s32 %s33, 1
      %s39 = ssub.s32 %s33, 2
      %s40 = sadd.s32 %s33, 1
      %s41 = ssub.s32 %s33, %s40
      %p42 = scmp.eq.s32.totalorder %s41, 0
      %s44 = sadd.s32 %s43, 1
      %s45 = scalar_select %p42, %s43, %s44
      %p48 = pneg %p42
      %p49 = scmp.eq.s32.totalorder %s33, 1
      %p50 = por %p48, %p49
      %p51 = scmp.ne.s32.totalorder %s43, %s46
      %p52 = scmp.eq.s32.totalorder %s33, 0
      %p53 = por %p51, %p52
      %p54 = scmp.ne.s32.totalorder %s43, %s46
      %p55 = scmp.eq.s32.totalorder %s38, 1
      %p56 = por %p54, %p55
      %p57 = scmp.ne.s32.totalorder %s46, %s47
      %p58 = scmp.eq.s32.totalorder %s38, 0
      %p59 = por %p57, %p58
      %p60 = scmp.ne.s32.totalorder %s46, %s47
      %p61 = scmp.eq.s32.totalorder %s39, 1
      %p62 = por %p60, %p61
      %p64 = scmp.ne.s32.totalorder %s47, %s63
      %p65 = scmp.eq.s32.totalorder %s39, 0
      %p66 = por %p64, %p65
      %s68 = sadd.s32 %s67, 1
      %p71 = scmp.eq.s32.totalorder %s33, 1
      %p72 = scmp.ne.s32.totalorder %s67, %s69
      %p73 = scmp.eq.s32.totalorder %s33, 0
      %p74 = por %p72, %p73
      %p75 = scmp.ne.s32.totalorder %s67, %s69
      %p76 = scmp.eq.s32.totalorder %s38, 1
      %p77 = por %p75, %p76
      %p78 = scmp.ne.s32.totalorder %s69, %s70
      %p79 = scmp.eq.s32.totalorder %s38, 0
      %p80 = por %p78, %p79
      %p81 = scmp.ne.s32.totalorder %s69, %s70
      %p82 = scmp.eq.s32.totalorder %s39, 1
      %p83 = por %p81, %p82
      %p85 = scmp.ne.s32.totalorder %s70, %s84
      %p86 = scmp.eq.s32.totalorder %s39, 0
      %p87 = por %p85, %p86
      %s89 = sadd.s32 %s88, 1
      %p92 = scmp.eq.s32.totalorder %s33, 1
      %p93 = scmp.ne.s32.totalorder %s88, %s90
      %p94 = scmp.eq.s32.totalorder %s33, 0
      %p95 = por %p93, %p94
      %p96 = scmp.ne.s32.totalorder %s88, %s90
      %p97 = scmp.eq.s32.totalorder %s38, 1
      %p98 = por %p96, %p97
      %p99 = scmp.ne.s32.totalorder %s90, %s91
      %p100 = scmp.eq.s32.totalorder %s38, 0
      %p101 = por %p99, %p100
      %p102 = scmp.ne.s32.totalorder %s90, %s91
      %p103 = scmp.eq.s32.totalorder %s39, 1
      %p104 = por %p102, %p103
      %p106 = scmp.ne.s32.totalorder %s91, %s105
      %p107 = scmp.eq.s32.totalorder %s39, 0
      %p108 = por %p106, %p107
      %s110 = sadd.s32 %s109, 1
      %p113 = scmp.eq.s32.totalorder %s33, 1
      %p114 = scmp.ne.s32.totalorder %s109, %s111
      %p115 = scmp.eq.s32.totalorder %s33, 0
      %p116 = por %p114, %p115
      %p117 = scmp.ne.s32.totalorder %s109, %s111
      %p118 = scmp.eq.s32.totalorder %s38, 1
      %p119 = por %p117, %p118
      %p120 = scmp.ne.s32.totalorder %s111, %s112
      %p121 = scmp.eq.s32.totalorder %s38, 0
      %p122 = por %p120, %p121
      %p123 = scmp.ne.s32.totalorder %s111, %s112
      %p124 = scmp.eq.s32.totalorder %s39, 1
      %p125 = por %p123, %p124
      %p127 = scmp.ne.s32.totalorder %s112, %s126
      %p128 = scmp.eq.s32.totalorder %s39, 0
      %p129 = por %p127, %p128
      %s131 = sadd.s32 %s130, 1
      %p134 = scmp.eq.s32.totalorder %s33, 1
      %p135 = scmp.ne.s32.totalorder %s130, %s132
      %p136 = scmp.eq.s32.totalorder %s33, 0
      %p137 = por %p135, %p136
      %p138 = scmp.ne.s32.totalorder %s130, %s132
      %p139 = scmp.eq.s32.totalorder %s38, 1
      %p140 = por %p138, %p139
      %p141 = scmp.ne.s32.totalorder %s132, %s133
      %p142 = scmp.eq.s32.totalorder %s38, 0
      %p143 = por %p141, %p142
      %p144 = scmp.ne.s32.totalorder %s132, %s133
      %p145 = scmp.eq.s32.totalorder %s39, 1
      %p146 = por %p144, %p145
      %p148 = scmp.ne.s32.totalorder %s133, %s147
      %p149 = scmp.eq.s32.totalorder %s39, 0
      %p150 = por %p148, %p149
      %s152 = sadd.s32 %s151, 1
      %p155 = scmp.eq.s32.totalorder %s33, 1
      %p156 = scmp.ne.s32.totalorder %s151, %s153
      %p157 = scmp.eq.s32.totalorder %s33, 0
      %p158 = por %p156, %p157
      %p159 = scmp.ne.s32.totalorder %s151, %s153
      %p160 = scmp.eq.s32.totalorder %s38, 1
      %p161 = por %p159, %p160
      %p162 = scmp.ne.s32.totalorder %s153, %s154
      %p163 = scmp.eq.s32.totalorder %s38, 0
      %p164 = por %p162, %p163
      %p165 = scmp.ne.s32.totalorder %s153, %s154
      %p166 = scmp.eq.s32.totalorder %s39, 1
      %p167 = por %p165, %p166
      %p169 = scmp.ne.s32.totalorder %s154, %s168
      %p170 = scmp.eq.s32.totalorder %s39, 0
      %p171 = por %p169, %p170
      %s173 = sadd.s32 %s172, 1
      %p176 = scmp.eq.s32.totalorder %s33, 1
      %p177 = scmp.ne.s32.totalorder %s172, %s174
      %p178 = scmp.eq.s32.totalorder %s33, 0
      %p179 = por %p177, %p178
      %p180 = scmp.ne.s32.totalorder %s172, %s174
      %p181 = scmp.eq.s32.totalorder %s38, 1
      %p182 = por %p180, %p181
      %p183 = scmp.ne.s32.totalorder %s174, %s175
      %p184 = scmp.eq.s32.totalorder %s38, 0
      %p185 = por %p183, %p184
      %p186 = scmp.ne.s32.totalorder %s174, %s175
      %p187 = scmp.eq.s32.totalorder %s39, 1
      %p188 = por %p186, %p187
      %p190 = scmp.ne.s32.totalorder %s175, %s189
      %p191 = scmp.eq.s32.totalorder %s39, 0
      %p192 = por %p190, %p191
      %s194 = sadd.s32 %s193, 1
      %p197 = scmp.eq.s32.totalorder %s33, 1
      %p198 = scmp.ne.s32.totalorder %s193, %s195
      %p199 = scmp.eq.s32.totalorder %s33, 0
      %p200 = por %p198, %p199
      %p201 = scmp.ne.s32.totalorder %s193, %s195
      %p202 = scmp.eq.s32.totalorder %s38, 1
      %p203 = por %p201, %p202
      %p204 = scmp.ne.s32.totalorder %s195, %s196
      %p205 = scmp.eq.s32.totalorder %s38, 0
      %p206 = por %p204, %p205
      %p207 = scmp.ne.s32.totalorder %s195, %s196
      %p208 = scmp.eq.s32.totalorder %s39, 1
      %p209 = por %p207, %p208
      %p211 = scmp.ne.s32.totalorder %s196, %s210
      %p212 = scmp.eq.s32.totalorder %s39, 0
      %p213 = por %p211, %p212
      %s215 = sadd.s32 %s214, 1
      %p218 = scmp.eq.s32.totalorder %s33, 1
      %p219 = scmp.ne.s32.totalorder %s214, %s216
      %p220 = scmp.eq.s32.totalorder %s33, 0
      %p221 = por %p219, %p220
      %p222 = scmp.ne.s32.totalorder %s214, %s216
      %p223 = scmp.eq.s32.totalorder %s38, 1
      %p224 = por %p222, %p223
      %p225 = scmp.ne.s32.totalorder %s216, %s217
      %p226 = scmp.eq.s32.totalorder %s38, 0
      %p227 = por %p225, %p226
      %p228 = scmp.ne.s32.totalorder %s216, %s217
      %p229 = scmp.eq.s32.totalorder %s39, 1
      %p230 = por %p228, %p229
      %p232 = scmp.ne.s32.totalorder %s217, %s231
      %p233 = scmp.eq.s32.totalorder %s39, 0
      %p234 = por %p232, %p233
      %s236 = sadd.s32 %s235, 1
      %p239 = scmp.eq.s32.totalorder %s33, 1
      %p240 = scmp.ne.s32.totalorder %s235, %s237
      %p241 = scmp.eq.s32.totalorder %s33, 0
      %p242 = por %p240, %p241
      %p243 = scmp.ne.s32.totalorder %s235, %s237
      %p244 = scmp.eq.s32.totalorder %s38, 1
      %p245 = por %p243, %p244
      %p246 = scmp.ne.s32.totalorder %s237, %s238
      %p247 = scmp.eq.s32.totalorder %s38, 0
      %p248 = por %p246, %p247
      %p249 = scmp.ne.s32.totalorder %s237, %s238
      %p250 = scmp.eq.s32.totalorder %s39, 1
      %p251 = por %p249, %p250
      %p253 = scmp.ne.s32.totalorder %s238, %s252
      %p254 = scmp.eq.s32.totalorder %s39, 0
      %p255 = por %p253, %p254
      %s257 = sadd.s32 %s256, 1
      %p260 = scmp.eq.s32.totalorder %s33, 1
      %p261 = scmp.ne.s32.totalorder %s256, %s258
      %p262 = scmp.eq.s32.totalorder %s33, 0
      %p263 = por %p261, %p262
      %p264 = scmp.ne.s32.totalorder %s256, %s258
      %p265 = scmp.eq.s32.totalorder %s38, 1
      %p266 = por %p264, %p265
      %p267 = scmp.ne.s32.totalorder %s258, %s259
      %p268 = scmp.eq.s32.totalorder %s38, 0
      %p269 = por %p267, %p268
      %p270 = scmp.ne.s32.totalorder %s258, %s259
      %p271 = scmp.eq.s32.totalorder %s39, 1
      %p272 = por %p270, %p271
      %p274 = scmp.ne.s32.totalorder %s259, %s273
      %p275 = scmp.eq.s32.totalorder %s39, 0
      %p276 = por %p274, %p275
      %s278 = sadd.s32 %s277, 1
      %p281 = scmp.eq.s32.totalorder %s33, 1
      %p282 = scmp.ne.s32.totalorder %s277, %s279
      %p283 = scmp.eq.s32.totalorder %s33, 0
      %p284 = por %p282, %p283
      %p285 = scmp.ne.s32.totalorder %s277, %s279
      %p286 = scmp.eq.s32.totalorder %s38, 1
      %p287 = por %p285, %p286
      %p288 = scmp.ne.s32.totalorder %s279, %s280
      %p289 = scmp.eq.s32.totalorder %s38, 0
      %p290 = por %p288, %p289
      %p291 = scmp.ne.s32.totalorder %s279, %s280
      %p292 = scmp.eq.s32.totalorder %s39, 1
      %p293 = por %p291, %p292
      %p295 = scmp.ne.s32.totalorder %s280, %s294
      %p296 = scmp.eq.s32.totalorder %s39, 0
      %p297 = por %p295, %p296
      %s299 = sadd.s32 %s298, 1
      %p302 = scmp.eq.s32.totalorder %s33, 1
      %p303 = scmp.ne.s32.totalorder %s298, %s300
      %p304 = scmp.eq.s32.totalorder %s33, 0
      %p305 = por %p303, %p304
      %p306 = scmp.ne.s32.totalorder %s298, %s300
      %p307 = scmp.eq.s32.totalorder %s38, 1
      %p308 = por %p306, %p307
      %p309 = scmp.ne.s32.totalorder %s300, %s301
      %p310 = scmp.eq.s32.totalorder %s38, 0
      %p311 = por %p309, %p310
      %p312 = scmp.ne.s32.totalorder %s300, %s301
      %p313 = scmp.eq.s32.totalorder %s39, 1
      %p314 = por %p312, %p313
      %p316 = scmp.ne.s32.totalorder %s301, %s315
      %p317 = scmp.eq.s32.totalorder %s39, 0
      %p318 = por %p316, %p317
      %s320 = sadd.s32 %s319, 1
      %p323 = scmp.eq.s32.totalorder %s33, 1
      %p324 = scmp.ne.s32.totalorder %s319, %s321
      %p325 = scmp.eq.s32.totalorder %s33, 0
      %p326 = por %p324, %p325
      %p327 = scmp.ne.s32.totalorder %s319, %s321
      %p328 = scmp.eq.s32.totalorder %s38, 1
      %p329 = por %p327, %p328
      %p330 = scmp.ne.s32.totalorder %s321, %s322
      %p331 = scmp.eq.s32.totalorder %s38, 0
      %p332 = por %p330, %p331
      %p333 = scmp.ne.s32.totalorder %s321, %s322
      %p334 = scmp.eq.s32.totalorder %s39, 1
      %p335 = por %p333, %p334
      %p337 = scmp.ne.s32.totalorder %s322, %s336
      %p338 = scmp.eq.s32.totalorder %s39, 0
      %p339 = por %p337, %p338
      %s341 = sadd.s32 %s340, 1
      %p344 = scmp.eq.s32.totalorder %s33, 1
      %p345 = scmp.ne.s32.totalorder %s340, %s342
      %p346 = scmp.eq.s32.totalorder %s33, 0
      %p347 = por %p345, %p346
      %p348 = scmp.ne.s32.totalorder %s340, %s342
      %p349 = scmp.eq.s32.totalorder %s38, 1
      %p350 = por %p348, %p349
      %p351 = scmp.ne.s32.totalorder %s342, %s343
      %p352 = scmp.eq.s32.totalorder %s38, 0
      %p353 = por %p351, %p352
      %p354 = scmp.ne.s32.totalorder %s342, %s343
      %p355 = scmp.eq.s32.totalorder %s39, 1
      %p356 = por %p354, %p355
      %p358 = scmp.ne.s32.totalorder %s343, %s357
      %p359 = scmp.eq.s32.totalorder %s39, 0
      %p360 = por %p358, %p359
      %s362 = sadd.s32 %s361, 1
      %p365 = scmp.eq.s32.totalorder %s33, 1
      %p366 = scmp.ne.s32.totalorder %s361, %s363
      %p367 = scmp.eq.s32.totalorder %s33, 0
      %p368 = por %p366, %p367
      %p369 = scmp.ne.s32.totalorder %s361, %s363
      %p370 = scmp.eq.s32.totalorder %s38, 1
      %p371 = por %p369, %p370
      %p372 = scmp.ne.s32.totalorder %s363, %s364
      %p373 = scmp.eq.s32.totalorder %s38, 0
      %p374 = por %p372, %p373
      %p375 = scmp.ne.s32.totalorder %s363, %s364
      %p376 = scmp.eq.s32.totalorder %s39, 1
      %p377 = por %p375, %p376
      %p379 = scmp.ne.s32.totalorder %s364, %s378
      %p380 = scmp.eq.s32.totalorder %s39, 0
      %p381 = por %p379, %p380
      %s383 = sadd.s32 %s382, 1
      %p386 = scmp.eq.s32.totalorder %s33, 1
      %p387 = scmp.ne.s32.totalorder %s382, %s384
      %p388 = scmp.eq.s32.totalorder %s33, 0
      %p389 = por %p387, %p388
      %p390 = scmp.ne.s32.totalorder %s382, %s384
      %p391 = scmp.eq.s32.totalorder %s38, 1
      %p392 = por %p390, %p391
      %p393 = scmp.ne.s32.totalorder %s384, %s385
      %p394 = scmp.eq.s32.totalorder %s38, 0
      %p395 = por %p393, %p394
      %p396 = scmp.ne.s32.totalorder %s384, %s385
      %p397 = scmp.eq.s32.totalorder %s39, 1
      %p398 = por %p396, %p397
      %p400 = scmp.ne.s32.totalorder %s385, %s399
      %p401 = scmp.eq.s32.totalorder %s39, 0
      %p402 = por %p400, %p401
      %s403 = ssub.s32 %s33, %s40
      %p404 = scmp.eq.s32.totalorder %s403, 0
      %s406 = sadd.s32 %s405, 1
      %s407 = scalar_select %p404, %s405, %s406
      %p410 = pneg %p404
      %p411 = scmp.eq.s32.totalorder %s33, 1
      %p412 = por %p410, %p411
      %p413 = scmp.ne.s32.totalorder %s405, %s408
      %p414 = scmp.eq.s32.totalorder %s33, 0
      %p415 = por %p413, %p414
      %p416 = scmp.ne.s32.totalorder %s405, %s408
      %p417 = scmp.eq.s32.totalorder %s38, 1
      %p418 = por %p416, %p417
      %p419 = scmp.ne.s32.totalorder %s408, %s409
      %p420 = scmp.eq.s32.totalorder %s38, 0
      %p421 = por %p419, %p420
      %p422 = scmp.ne.s32.totalorder %s408, %s409
      %p423 = scmp.eq.s32.totalorder %s39, 1
      %p424 = por %p422, %p423
      %p426 = scmp.ne.s32.totalorder %s409, %s425
      %p427 = scmp.eq.s32.totalorder %s39, 0
      %p428 = por %p426, %p427
      %p429 = scmp.le.s32.totalorder 1, %s33
      %p430 = scmp.lt.s32.totalorder %s33, 3
      %p431 = pnand %p429, %p430
      %p432 = pneg %p431
      // Predicated region
      $region9: #{tpu_custom_call.1} parent=5 // pred_check
        _
      $region10: #{tpu_custom_call.1} parent=5 // pred_check_branch
        %434 = sbr.rel (%p431) target = $region12
      $region11: #{tpu_custom_call.1} parent=5 // pred_region
        %s435 = ssub.s32 %s33, 1
        // Predicated region
        $region13: #{tpu_custom_call.1} parent=11 // pred_check
          %p436 = pneg %p80
        $region14: #{tpu_custom_call.1} parent=11 // pred_check_branch
          %438 = sbr.rel (%p436) target = $region16
        $region15: #{tpu_custom_call.1} parent=11 // pred_region
          %s440 = ssub.s32 256, 256
          %441 = vsyncadd [#allocation6], %s440
          %s442 = sshll.u32 [#allocation5], 4
          %s443 = int_to_ptr.vmem [resolvable:$true] %s442
          %448 = dma.hbm_to_vmem [thread:$0]  %s1, 256, %s443, [#allocation6], 128, 128, 8
        $region16: #{tpu_custom_call.1} parent=11 // pred_fallthru
          _
        // Predicated region
        $region17: #{tpu_custom_call.1} parent=11 // pred_check
          %p449 = pneg %p101
        $region18: #{tpu_custom_call.1} parent=11 // pred_check_branch
          %451 = sbr.rel (%p449) target = $region20
        $region19: #{tpu_custom_call.1} parent=11 // pred_region
          _
        $region20: #{tpu_custom_call.1} parent=11 // pred_fallthru
          _
        // Predicated region
        $region21: #{tpu_custom_call.1} parent=11 // pred_check
          %p452 = pneg %p122
        $region22: #{tpu_custom_call.1} parent=11 // pred_check_branch
          %454 = sbr.rel (%p452) target = $region24
        $region23: #{tpu_custom_call.1} parent=11 // pred_region
          %s456 = ssub.s32 512, 512
          %457 = vsyncadd [#allocation6], %s456
          %s458 = sshll.u32 [#allocation7], 4
          %s459 = int_to_ptr.vmem [resolvable:$true] %s458
          %464 = dma.hbm_to_vmem [thread:$0]  %s3, 512, %s459, [#allocation6], 128, 128, 8
        $region24: #{tpu_custom_call.1} parent=11 // pred_fallthru
          _
        // Predicated region
        $region25: #{tpu_custom_call.1} parent=11 // pred_check
          %p465 = pneg %p143
        $region26: #{tpu_custom_call.1} parent=11 // pred_check_branch
          %467 = sbr.rel (%p465) target = $region28
        $region27: #{tpu_custom_call.1} parent=11 // pred_region
          _
        $region28: #{tpu_custom_call.1} parent=11 // pred_fallthru
          _
        // Predicated region
        $region29: #{tpu_custom_call.1} parent=11 // pred_check
          %p468 = pneg %p164
        $region30: #{tpu_custom_call.1} parent=11 // pred_check_branch
          %470 = sbr.rel (%p468) target = $region32
        $region31: #{tpu_custom_call.1} parent=11 // pred_region
          %s472 = ssub.s32 512, 512
          %473 = vsyncadd [#allocation9], %s472
          %s474 = sshll.u32 [#allocation8], 4
          %s475 = int_to_ptr.vmem [resolvable:$true] %s474
          %480 = dma.hbm_to_vmem [thread:$0]  %s5, 512, %s475, [#allocation9], 128, 128, 8
        $region32: #{tpu_custom_call.1} parent=11 // pred_fallthru
          _
        // Predicated region
        $region33: #{tpu_custom_call.1} parent=11 // pred_check
          %p481 = pneg %p185
        $region34: #{tpu_custom_call.1} parent=11 // pred_check_branch
          %483 = sbr.rel (%p481) target = $region36
        $region35: #{tpu_custom_call.1} parent=11 // pred_region
          %s485 = ssub.s32 16, 16
          %486 = vsyncadd [#allocation9], %s485
          %s488 = sshll.u32 [#allocation10], 4
          %s489 = int_to_ptr.vmem [resolvable:$true] %s488
          %491 = dma.hbm_to_vmem [thread:$0]  %s6, 16, %s489, [#allocation9]
        $region36: #{tpu_custom_call.1} parent=11 // pred_fallthru
          _
        // Predicated region
        $region37: #{tpu_custom_call.1} parent=11 // pred_check
          %p492 = pneg %p206
        $region38: #{tpu_custom_call.1} parent=11 // pred_check_branch
          %494 = sbr.rel (%p492) target = $region40
        $region39: #{tpu_custom_call.1} parent=11 // pred_region
          %s496 = ssub.s32 16, 16
          %497 = vsyncadd [#allocation12], %s496
          %s499 = sshll.u32 [#allocation11], 4
          %s500 = int_to_ptr.vmem [resolvable:$true] %s499
          %502 = dma.hbm_to_vmem [thread:$0]  %s7, 16, %s500, [#allocation12]
        $region40: #{tpu_custom_call.1} parent=11 // pred_fallthru
          _
        // Predicated region
        $region41: #{tpu_custom_call.1} parent=11 // pred_check
          %p503 = pneg %p227
        $region42: #{tpu_custom_call.1} parent=11 // pred_check_branch
          %505 = sbr.rel (%p503) target = $region44
        $region43: #{tpu_custom_call.1} parent=11 // pred_region
          %s507 = ssub.s32 16, 16
          %508 = vsyncadd [#allocation12], %s507
          %s510 = sshll.u32 [#allocation13], 4
          %s511 = int_to_ptr.vmem [resolvable:$true] %s510
          %513 = dma.hbm_to_vmem [thread:$0]  %s8, 16, %s511, [#allocation12]
        $region44: #{tpu_custom_call.1} parent=11 // pred_fallthru
          _
        // Predicated region
        $region45: #{tpu_custom_call.1} parent=11 // pred_check
          %p514 = pneg %p248
        $region46: #{tpu_custom_call.1} parent=11 // pred_check_branch
          %516 = sbr.rel (%p514) target = $region48
        $region47: #{tpu_custom_call.1} parent=11 // pred_region
          _
        $region48: #{tpu_custom_call.1} parent=11 // pred_fallthru
          _
        // Predicated region
        $region49: #{tpu_custom_call.1} parent=11 // pred_check
          %p517 = pneg %p269
        $region50: #{tpu_custom_call.1} parent=11 // pred_check_branch
          %519 = sbr.rel (%p517) target = $region52
        $region51: #{tpu_custom_call.1} parent=11 // pred_region
          _
        $region52: #{tpu_custom_call.1} parent=11 // pred_fallthru
          _
        // Predicated region
        $region53: #{tpu_custom_call.1} parent=11 // pred_check
          %p520 = pneg %p290
        $region54: #{tpu_custom_call.1} parent=11 // pred_check_branch
          %522 = sbr.rel (%p520) target = $region56
        $region55: #{tpu_custom_call.1} parent=11 // pred_region
          %s524 = ssub.s32 512, 512
          %525 = vsyncadd [#allocation15], %s524
          %s526 = sshll.u32 [#allocation14], 4
          %s527 = int_to_ptr.vmem [resolvable:$true] %s526
          %532 = dma.hbm_to_vmem [thread:$0]  %s11, 512, %s527, [#allocation15], 128, 128, 8
        $region56: #{tpu_custom_call.1} parent=11 // pred_fallthru
          _
        // Predicated region
        $region57: #{tpu_custom_call.1} parent=11 // pred_check
          %p533 = pneg %p311
        $region58: #{tpu_custom_call.1} parent=11 // pred_check_branch
          %535 = sbr.rel (%p533) target = $region60
        $region59: #{tpu_custom_call.1} parent=11 // pred_region
          _
        $region60: #{tpu_custom_call.1} parent=11 // pred_fallthru
          _
        // Predicated region
        $region61: #{tpu_custom_call.1} parent=11 // pred_check
          %p536 = pneg %p332
        $region62: #{tpu_custom_call.1} parent=11 // pred_check_branch
          %538 = sbr.rel (%p536) target = $region64
        $region63: #{tpu_custom_call.1} parent=11 // pred_region
          _
        $region64: #{tpu_custom_call.1} parent=11 // pred_fallthru
          _
        // Predicated region
        $region65: #{tpu_custom_call.1} parent=11 // pred_check
          %p539 = pneg %p353
        $region66: #{tpu_custom_call.1} parent=11 // pred_check_branch
          %541 = sbr.rel (%p539) target = $region68
        $region67: #{tpu_custom_call.1} parent=11 // pred_region
          _
        $region68: #{tpu_custom_call.1} parent=11 // pred_fallthru
          _
        // Predicated region
        $region69: #{tpu_custom_call.1} parent=11 // pred_check
          %p542 = pneg %p374
        $region70: #{tpu_custom_call.1} parent=11 // pred_check_branch
          %544 = sbr.rel (%p542) target = $region72
        $region71: #{tpu_custom_call.1} parent=11 // pred_region
          %s546 = ssub.s32 512, 512
          %547 = vsyncadd [#allocation15], %s546
          %s548 = sshll.u32 [#allocation16], 4
          %s549 = int_to_ptr.vmem [resolvable:$true] %s548
          %554 = dma.hbm_to_vmem [thread:$0]  %s15, 512, %s549, [#allocation15], 128, 128, 8
        $region72: #{tpu_custom_call.1} parent=11 // pred_fallthru
          _
        // Predicated region
        $region73: #{tpu_custom_call.1} parent=11 // pred_check
          %p555 = pneg %p395
        $region74: #{tpu_custom_call.1} parent=11 // pred_check_branch
          %557 = sbr.rel (%p555) target = $region76
        $region75: #{tpu_custom_call.1} parent=11 // pred_region
          _
        $region76: #{tpu_custom_call.1} parent=11 // pred_fallthru
          _
      $region12: #{tpu_custom_call.1} parent=5 // pred_fallthru
        _
      %p558 = scmp.lt.s32.totalorder %s33, 2
      // Predicated region
      $region77: #{tpu_custom_call.1} parent=5 // pred_check
        %p559 = pneg %p558
      $region78: #{tpu_custom_call.1} parent=5 // pred_check_branch
        %561 = sbr.rel (%p559) target = $region80
      $region79: #{tpu_custom_call.1} parent=5 // pred_region
        // Predicated region
        $region81: #{tpu_custom_call.1} parent=79 // pred_check
          %p562 = pneg %p53
        $region82: #{tpu_custom_call.1} parent=79 // pred_check_branch
          %564 = sbr.rel (%p562) target = $region84
        $region83: #{tpu_custom_call.1} parent=79 // pred_region
          %s565 = sand.u32 %s43, 1
          %s566 = scalar_lea.sflag [#allocation3], %s565
          %s567 = sand.u32 %s43, 1
          %s568 = smul.addr %s567, 8
          %s569 = scalar_lea.vmem [#allocation2], %s568
          %s571 = ssub.s32 128, 128
          %572 = vsyncadd %s566, %s571
          %s573 = smul.addr %s33, 128
          %s574 = scalar_lea.hbm %s0, %s573
          %s576 = sshll.u32 %s569, 4
          %s577 = int_to_ptr.vmem [resolvable:$true] %s576
          %579 = dma.hbm_to_vmem [thread:$0]  %s574, 128, %s577, %s566
        $region84: #{tpu_custom_call.1} parent=79 // pred_fallthru
          _
      $region80: #{tpu_custom_call.1} parent=5 // pred_fallthru
        _
      %p580 = scmp.le.s32.totalorder 1, %s33
      %p581 = scmp.lt.s32.totalorder %s33, 3
      %p582 = pnand %p580, %p581
      %p583 = pneg %p582
      // Predicated region
      $region85: #{tpu_custom_call.1} parent=5 // pred_check
        _
      $region86: #{tpu_custom_call.1} parent=5 // pred_check_branch
        %585 = sbr.rel (%p582) target = $region88
      $region87: #{tpu_custom_call.1} parent=5 // pred_region
        %s586 = ssub.s32 %s33, 1
        %s587 = sand.u32 %s46, 1
        %s588 = scalar_lea.sflag [#allocation3], %s587
        %s589 = sand.u32 %s46, 1
        %s590 = smul.addr %s589, 8
        %s591 = scalar_lea.vmem [#allocation2], %s590
        // Predicated region
        $region89: #{tpu_custom_call.1} parent=87 // pred_check
          %p592 = pneg %p59
        $region90: #{tpu_custom_call.1} parent=87 // pred_check_branch
          %594 = sbr.rel (%p592) target = $region92
        $region91: #{tpu_custom_call.1} parent=87 // pred_region
          %595 = dma.done %s588, 128
        $region92: #{tpu_custom_call.1} parent=87 // pred_fallthru
          _
        // Predicated region
        $region93: #{tpu_custom_call.1} parent=87 // pred_check
          %p596 = pneg %p80
        $region94: #{tpu_custom_call.1} parent=87 // pred_check_branch
          %598 = sbr.rel (%p596) target = $region96
        $region95: #{tpu_custom_call.1} parent=87 // pred_region
          %599 = dma.done [#allocation6], 256
        $region96: #{tpu_custom_call.1} parent=87 // pred_fallthru
          _
        // Predicated region
        $region97: #{tpu_custom_call.1} parent=87 // pred_check
          %p600 = pneg %p122
        $region98: #{tpu_custom_call.1} parent=87 // pred_check_branch
          %602 = sbr.rel (%p600) target = $region100
        $region99: #{tpu_custom_call.1} parent=87 // pred_region
          %603 = dma.done [#allocation6], 512
        $region100: #{tpu_custom_call.1} parent=87 // pred_fallthru
          _
        // Predicated region
        $region101: #{tpu_custom_call.1} parent=87 // pred_check
          %p604 = pneg %p164
        $region102: #{tpu_custom_call.1} parent=87 // pred_check_branch
          %606 = sbr.rel (%p604) target = $region104
        $region103: #{tpu_custom_call.1} parent=87 // pred_region
          %607 = dma.done [#allocation9], 512
        $region104: #{tpu_custom_call.1} parent=87 // pred_fallthru
          _
        // Predicated region
        $region105: #{tpu_custom_call.1} parent=87 // pred_check
          %p608 = pneg %p185
        $region106: #{tpu_custom_call.1} parent=87 // pred_check_branch
          %610 = sbr.rel (%p608) target = $region108
        $region107: #{tpu_custom_call.1} parent=87 // pred_region
          %611 = dma.done [#allocation9], 16
        $region108: #{tpu_custom_call.1} parent=87 // pred_fallthru
          _
        // Predicated region
        $region109: #{tpu_custom_call.1} parent=87 // pred_check
          %p612 = pneg %p206
        $region110: #{tpu_custom_call.1} parent=87 // pred_check_branch
          %614 = sbr.rel (%p612) target = $region112
        $region111: #{tpu_custom_call.1} parent=87 // pred_region
          %615 = dma.done [#allocation12], 16
        $region112: #{tpu_custom_call.1} parent=87 // pred_fallthru
          _
        // Predicated region
        $region113: #{tpu_custom_call.1} parent=87 // pred_check
          %p616 = pneg %p227
        $region114: #{tpu_custom_call.1} parent=87 // pred_check_branch
          %618 = sbr.rel (%p616) target = $region116
        $region115: #{tpu_custom_call.1} parent=87 // pred_region
          %619 = dma.done [#allocation12], 16
        $region116: #{tpu_custom_call.1} parent=87 // pred_fallthru
          _
        // Predicated region
        $region117: #{tpu_custom_call.1} parent=87 // pred_check
          %p620 = pneg %p290
        $region118: #{tpu_custom_call.1} parent=87 // pred_check_branch
          %622 = sbr.rel (%p620) target = $region120
        $region119: #{tpu_custom_call.1} parent=87 // pred_region
          %623 = dma.done [#allocation15], 512
        $region120: #{tpu_custom_call.1} parent=87 // pred_fallthru
          _
        // Predicated region
        $region121: #{tpu_custom_call.1} parent=87 // pred_check
          %p624 = pneg %p374
        $region122: #{tpu_custom_call.1} parent=87 // pred_check_branch
          %626 = sbr.rel (%p624) target = $region124
        $region123: #{tpu_custom_call.1} parent=87 // pred_region
          %627 = dma.done [#allocation15], 512
        $region124: #{tpu_custom_call.1} parent=87 // pred_fallthru
          _
        %s628 = sand.u32 %s46, 1
        %s629 = scalar_lea.sflag [#allocation3], %s628
        %s630 = sand.u32 %s46, 1
        %s631 = smul.addr %s630, 8
        %s632 = scalar_lea.vmem [#allocation2], %s631
        %p633 = pneg %p59
        %p634 = pneg %p56
        %p635 = pneg %p80
        %p636 = pneg %p77
        %p637 = pneg %p101
        %p638 = pneg %p98
        %p639 = pneg %p122
        %p640 = pneg %p119
        %p641 = pneg %p143
        %p642 = pneg %p140
        %p643 = pneg %p164
        %p644 = pneg %p161
        %p645 = pneg %p185
        %p646 = pneg %p182
        %p647 = pneg %p206
        %p648 = pneg %p203
        %p649 = pneg %p227
        %p650 = pneg %p224
        %p651 = pneg %p248
        %p652 = pneg %p245
        %p653 = pneg %p269
        %p654 = pneg %p266
        %p655 = pneg %p290
        %p656 = pneg %p287
        %p657 = pneg %p311
        %p658 = pneg %p308
        %p659 = pneg %p332
        %p660 = pneg %p329
        %p661 = pneg %p353
        %p662 = pneg %p350
        %p663 = pneg %p374
        %p664 = pneg %p371
        %p665 = pneg %p395
        %p666 = pneg %p392
        %p667 = pneg %p421
        %p668 = pneg %p418
        %s669 = sand.u32 %s408, 1
        %s670 = scalar_lea.sflag [#allocation4], %s669
        %s671 = sand.u32 %s408, 1
        %s672 = smul.addr %s671, 8
        %s673 = scalar_lea.vmem [#allocation17], %s672
        %v674 = vld [vmem:[%s591] sm:$0xff]
        %vm675 = vcmp.ne.f32.partialorder %v674, %v674
        %v676 = vsel %vm675, 0.0, %v674
        %v677 = vld [vmem:[#allocation5] sm:$0xff]
        %v678 = vld [vmem:[#allocation5 + $0x8] sm:$0xff]
        %v679 = vld [vmem:[%s2] sm:$0x1]
        %v681 = vlaneseq
        %v682 = vshrl.u32 %v681, 7
        %v683 = vsub.s32 0, %v682
        %v684 = vrot.slane %v679, %v683
        %vm686 = vcmask 130048
        %v688 = vsel %vm686, %v676, 0
        %690 = vmatprep.subr.mxu0 0.0
        %691 = vmatpush1.msra.mxu0 %v677
        %692 = vmatprep.subr.mxu0 0.0
        %693 = vmatpush1.msra.mxu0 %v678
        %694 = vmatprep.subr.mxu0 0.0
        %695 = vmatpush1.msra.mxu0 0.0
        %696 = vmatprep.subr.mxu0 0.0
        %697 = vmatpush1.msra.mxu0 0.0
        %698 = vmatprep.subr.mxu0 0.0
        %699 = vmatpush1.msra.mxu0 0.0
        %700 = vmatprep.subr.mxu0 0.0
        %701 = vmatpush1.msra.mxu0 0.0
        %702 = vmatprep.subr.mxu0 0.0
        %703 = vmatpush1.msra.mxu0 0.0
        %704 = vmatprep.subr.mxu0 0.0
        %705 = vmatpush1.msra.mxu0 0.0
        %706 = vmatprep.subr.mxu0 0.0
        %707 = vmatpush1.msra.mxu0 0.0
        %708 = vmatprep.subr.mxu0 0.0
        %709 = vmatpush1.msra.mxu0 0.0
        %710 = vmatprep.subr.mxu0 0.0
        %711 = vmatpush1.msra.mxu0 0.0
        %712 = vmatprep.subr.mxu0 0.0
        %713 = vmatpush1.msra.mxu0 0.0
        %714 = vmatprep.subr.mxu0 0.0
        %715 = vmatpush1.msra.mxu0 0.0
        %716 = vmatprep.subr.mxu0 0.0
        %717 = vmatpush1.msra.mxu0 0.0
        %718 = vmatprep.subr.mxu0 0.0
        %719 = vmatpush1.msra.mxu0 0.0
        %720 = vmatprep.subr.mxu0 0.0
        %721 = vmatpush1.msra.mxu0 0.0
        %722 = vmatprep.subr.mxu0 0.0
        %723 = vmatpush1.msra.mxu0 0.0
        %724 = vmatprep.subr.mxu0 0.0
        %725 = vmatpush1.msra.mxu0 0.0
        %726 = vmatprep.subr.mxu0 0.0
        %727 = vmatpush1.msra.mxu0 0.0
        %728 = vmatprep.subr.mxu0 0.0
        %729 = vmatpush1.msra.mxu0 0.0
        %730 = vmatprep.subr.mxu0 0.0
        %731 = vmatpush1.msra.mxu0 0.0
        %732 = vmatprep.subr.mxu0 0.0
        %733 = vmatpush1.msra.mxu0 0.0
        %734 = vmatprep.subr.mxu0 0.0
        %735 = vmatpush1.msra.mxu0 0.0
        %736 = vmatprep.subr.mxu0 0.0
        %737 = vmatpush1.msra.mxu0 0.0
        %738 = vmatprep.subr.mxu0 0.0
        %739 = vmatpush1.msra.mxu0 0.0
        %740 = vmatprep.subr.mxu0 0.0
        %741 = vmatpush1.msra.mxu0 0.0
        %742 = vmatprep.subr.mxu0 0.0
        %743 = vmatpush1.msra.mxu0 0.0
        %744 = vmatprep.subr.mxu0 0.0
        %745 = vmatpush1.msra.mxu0 0.0
        %746 = vmatprep.subr.mxu0 0.0
        %747 = vmatpush1.msra.mxu0 0.0
        %748 = vmatprep.subr.mxu0 0.0
        %749 = vmatpush1.msra.mxu0 0.0
        %750 = vmatprep.subr.mxu0 0.0
        %751 = vmatpush1.msra.mxu0 0.0
        %752 = vmatprep.subr.mxu0 0.0
        %753 = vmatpush1.msra.mxu0 0.0
        %754 = vmatprep.mubr.f32.mxu0 0.0
        %755 = vmatmul.mubr.f32.gmra.mrb[0].mxu0 %v688
        %v756 = vpop.f32.mrb[0].mxu0
        %v757 = vadd.f32 %v684, %v756
        %v758 = vpop.f32.mrb[0].mxu0
        %759 = vdwg.mxu0
        %v760 = vld [vmem:[#allocation7] sm:$0xff]
        %v761 = vld [vmem:[#allocation7 + $0x8] sm:$0xff]
        %v762 = vld [vmem:[#allocation7 + $0x10] sm:$0xff]
        %v763 = vld [vmem:[#allocation7 + $0x18] sm:$0xff]
        %v764 = vld [vmem:[%s4] sm:$0x1]
        %v766 = vlaneseq
        %v767 = vshrl.u32 %v766, 7
        %v768 = vsub.s32 0, %v767
        %v769 = vrot.slane %v764, %v768
        %vm771 = vcmask 261120
        %v773 = vsel %vm771, %v757, 0
        %775 = vmatprep.subr.mxu0 0.0
        %776 = vmatpush1.msra.mxu0 %v760
        %777 = vmatprep.subr.mxu0 0.0
        %778 = vmatpush1.msra.mxu0 %v761
        %779 = vmatprep.subr.mxu0 0.0
        %780 = vmatpush1.msra.mxu0 %v762
        %781 = vmatprep.subr.mxu0 0.0
        %782 = vmatpush1.msra.mxu0 %v763
        %783 = vmatprep.subr.mxu0 0.0
        %784 = vmatpush1.msra.mxu0 0.0
        %785 = vmatprep.subr.mxu0 0.0
        %786 = vmatpush1.msra.mxu0 0.0
        %787 = vmatprep.subr.mxu0 0.0
        %788 = vmatpush1.msra.mxu0 0.0
        %789 = vmatprep.subr.mxu0 0.0
        %790 = vmatpush1.msra.mxu0 0.0
        %791 = vmatprep.subr.mxu0 0.0
        %792 = vmatpush1.msra.mxu0 0.0
        %793 = vmatprep.subr.mxu0 0.0
        %794 = vmatpush1.msra.mxu0 0.0
        %795 = vmatprep.subr.mxu0 0.0
        %796 = vmatpush1.msra.mxu0 0.0
        %797 = vmatprep.subr.mxu0 0.0
        %798 = vmatpush1.msra.mxu0 0.0
        %799 = vmatprep.subr.mxu0 0.0
        %800 = vmatpush1.msra.mxu0 0.0
        %801 = vmatprep.subr.mxu0 0.0
        %802 = vmatpush1.msra.mxu0 0.0
        %803 = vmatprep.subr.mxu0 0.0
        %804 = vmatpush1.msra.mxu0 0.0
        %805 = vmatprep.subr.mxu0 0.0
        %806 = vmatpush1.msra.mxu0 0.0
        %807 = vmatprep.subr.mxu0 0.0
        %808 = vmatpush1.msra.mxu0 0.0
        %809 = vmatprep.subr.mxu0 0.0
        %810 = vmatpush1.msra.mxu0 0.0
        %811 = vmatprep.subr.mxu0 0.0
        %812 = vmatpush1.msra.mxu0 0.0
        %813 = vmatprep.subr.mxu0 0.0
        %814 = vmatpush1.msra.mxu0 0.0
        %815 = vmatprep.subr.mxu0 0.0
        %816 = vmatpush1.msra.mxu0 0.0
        %817 = vmatprep.subr.mxu0 0.0
        %818 = vmatpush1.msra.mxu0 0.0
        %819 = vmatprep.subr.mxu0 0.0
        %820 = vmatpush1.msra.mxu0 0.0
        %821 = vmatprep.subr.mxu0 0.0
        %822 = vmatpush1.msra.mxu0 0.0
        %823 = vmatprep.subr.mxu0 0.0
        %824 = vmatpush1.msra.mxu0 0.0
        %825 = vmatprep.subr.mxu0 0.0
        %826 = vmatpush1.msra.mxu0 0.0
        %827 = vmatprep.subr.mxu0 0.0
        %828 = vmatpush1.msra.mxu0 0.0
        %829 = vmatprep.subr.mxu0 0.0
        %830 = vmatpush1.msra.mxu0 0.0
        %831 = vmatprep.subr.mxu0 0.0
        %832 = vmatpush1.msra.mxu0 0.0
        %833 = vmatprep.subr.mxu0 0.0
        %834 = vmatpush1.msra.mxu0 0.0
        %835 = vmatprep.subr.mxu0 0.0
        %836 = vmatpush1.msra.mxu0 0.0
        %837 = vmatprep.subr.mxu0 0.0
        %838 = vmatpush1.msra.mxu0 0.0
        %839 = vmatprep.mubr.f32.mxu0 0.0
        %840 = vmatmul.mubr.f32.gmra.mrb[0].mxu0 %v773
        %v841 = vpop.f32.mrb[0].mxu0
        %v842 = vadd.f32 %v769, %v841
        %v843 = vpop.f32.mrb[0].mxu0
        %844 = vdwg.mxu0
        %846 = vrot.lane.b32.xlu0 %v842, 96
        %v847 = vpop.permute.xlu0 %846
        %vm848 = vcmask 64512
        %v849 = vsel %vm848, %v842, 0
        %v851 = vsel %vm848, %v847, 0
        %853 = vmatprep.subr.mxu0 0.0
        %854 = vmatpush1.xpose.msra.mxu0 %v851
        %855 = vmatprep.subr.mxu0 0.0
        %856 = vmatpush1.xpose.msra.mxu0 0.0
        %857 = vmatprep.subr.mxu0 0.0
        %858 = vmatpush1.xpose.msra.mxu0 0.0
        %859 = vmatprep.subr.mxu0 0.0
        %860 = vmatpush1.xpose.msra.mxu0 0.0
        %861 = vmatprep.subr.mxu0 0.0
        %862 = vmatpush1.xpose.msra.mxu0 0.0
        %863 = vmatprep.subr.mxu0 0.0
        %864 = vmatpush1.xpose.msra.mxu0 0.0
        %865 = vmatprep.subr.mxu0 0.0
        %866 = vmatpush1.xpose.msra.mxu0 0.0
        %867 = vmatprep.subr.mxu0 0.0
        %868 = vmatpush1.xpose.msra.mxu0 0.0
        %869 = vmatprep.subr.mxu0 0.0
        %870 = vmatpush1.xpose.msra.mxu0 0.0
        %871 = vmatprep.subr.mxu0 0.0
        %872 = vmatpush1.xpose.msra.mxu0 0.0
        %873 = vmatprep.subr.mxu0 0.0
        %874 = vmatpush1.xpose.msra.mxu0 0.0
        %875 = vmatprep.subr.mxu0 0.0
        %876 = vmatpush1.xpose.msra.mxu0 0.0
        %877 = vmatprep.subr.mxu0 0.0
        %878 = vmatpush1.xpose.msra.mxu0 0.0
        %879 = vmatprep.subr.mxu0 0.0
        %880 = vmatpush1.xpose.msra.mxu0 0.0
        %881 = vmatprep.subr.mxu0 0.0
        %882 = vmatpush1.xpose.msra.mxu0 0.0
        %883 = vmatprep.subr.mxu0 0.0
        %884 = vmatpush1.xpose.msra.mxu0 0.0
        %885 = vmatprep.subr.mxu0 0.0
        %886 = vmatpush1.xpose.msra.mxu0 0.0
        %887 = vmatprep.subr.mxu0 0.0
        %888 = vmatpush1.xpose.msra.mxu0 0.0
        %889 = vmatprep.subr.mxu0 0.0
        %890 = vmatpush1.xpose.msra.mxu0 0.0
        %891 = vmatprep.subr.mxu0 0.0
        %892 = vmatpush1.xpose.msra.mxu0 0.0
        %893 = vmatprep.subr.mxu0 0.0
        %894 = vmatpush1.xpose.msra.mxu0 0.0
        %895 = vmatprep.subr.mxu0 0.0
        %896 = vmatpush1.xpose.msra.mxu0 0.0
        %897 = vmatprep.subr.mxu0 0.0
        %898 = vmatpush1.xpose.msra.mxu0 0.0
        %899 = vmatprep.subr.mxu0 0.0
        %900 = vmatpush1.xpose.msra.mxu0 0.0
        %901 = vmatprep.subr.mxu0 0.0
        %902 = vmatpush1.xpose.msra.mxu0 0.0
        %903 = vmatprep.subr.mxu0 0.0
        %904 = vmatpush1.xpose.msra.mxu0 0.0
        %905 = vmatprep.subr.mxu0 0.0
        %906 = vmatpush1.xpose.msra.mxu0 0.0
        %907 = vmatprep.subr.mxu0 0.0
        %908 = vmatpush1.xpose.msra.mxu0 0.0
        %909 = vmatprep.subr.mxu0 0.0
        %910 = vmatpush1.xpose.msra.mxu0 0.0
        %911 = vmatprep.subr.mxu0 0.0
        %912 = vmatpush1.xpose.msra.mxu0 0.0
        %913 = vmatprep.subr.mxu0 0.0
        %914 = vmatpush1.xpose.msra.mxu0 0.0
        %915 = vmatprep.subr.mxu0 0.0
        %916 = vmatpush1.xpose.msra.mxu0 0.0
        %917 = vmatprep.mubr.f32.mxu0 0.0
        %918 = vmatmul.mubr.f32.gmra.mrb[0].mxu0 %v849
        %v919 = vpop.f32.mrb[0].mxu0
        %v920 = vadd.f32 0.0, %v919
        %v921 = vpop.f32.mrb[0].mxu0
        %922 = vdwg.mxu0
        %v923 = vmul.f32 %v920, 0.35355338
        %v924 = vsel %vm848, %v923, -inf
        %925 = vmax.xlane.f32.xlu0 %v924
        %v926 = vpop.xlane.xlu0 %925
        %v927 = vsub.f32 %v923, %v926
        %v928 = vmul.f32 %v927, 1.442695
        %v929 = vpow.pop %v928
        %v930 = vsel %vm848, %v929, 0.0
        %931 = vadd.xlane.f32.xlu0 %v930
        %v932 = vpop.xlane.xlu0 %931
        %v933 = vrcp.pop %v932
        %v934 = vmul.f32 %v929, %v933
        %935 = vrot.lane.b32.xlu0 %v842, 64
        %v936 = vpop.permute.xlu0 %935
        %v939 = vsel %vm848, %v934, 0
        %941 = vmatprep.subr.mxu0 0.0
        %942 = vmatpush1.msra.mxu0 %v936
        %943 = vmatprep.subr.mxu0 0.0
        %944 = vmatpush1.msra.mxu0 0.0
        %945 = vmatprep.subr.mxu0 0.0
        %946 = vmatpush1.msra.mxu0 0.0
        %947 = vmatprep.subr.mxu0 0.0
        %948 = vmatpush1.msra.mxu0 0.0
        %949 = vmatprep.subr.mxu0 0.0
        %950 = vmatpush1.msra.mxu0 0.0
        %951 = vmatprep.subr.mxu0 0.0
        %952 = vmatpush1.msra.mxu0 0.0
        %953 = vmatprep.subr.mxu0 0.0
        %954 = vmatpush1.msra.mxu0 0.0
        %955 = vmatprep.subr.mxu0 0.0
        %956 = vmatpush1.msra.mxu0 0.0
        %957 = vmatprep.subr.mxu0 0.0
        %958 = vmatpush1.msra.mxu0 0.0
        %959 = vmatprep.subr.mxu0 0.0
        %960 = vmatpush1.msra.mxu0 0.0
        %961 = vmatprep.subr.mxu0 0.0
        %962 = vmatpush1.msra.mxu0 0.0
        %963 = vmatprep.subr.mxu0 0.0
        %964 = vmatpush1.msra.mxu0 0.0
        %965 = vmatprep.subr.mxu0 0.0
        %966 = vmatpush1.msra.mxu0 0.0
        %967 = vmatprep.subr.mxu0 0.0
        %968 = vmatpush1.msra.mxu0 0.0
        %969 = vmatprep.subr.mxu0 0.0
        %970 = vmatpush1.msra.mxu0 0.0
        %971 = vmatprep.subr.mxu0 0.0
        %972 = vmatpush1.msra.mxu0 0.0
        %973 = vmatprep.subr.mxu0 0.0
        %974 = vmatpush1.msra.mxu0 0.0
        %975 = vmatprep.subr.mxu0 0.0
        %976 = vmatpush1.msra.mxu0 0.0
        %977 = vmatprep.subr.mxu0 0.0
        %978 = vmatpush1.msra.mxu0 0.0
        %979 = vmatprep.subr.mxu0 0.0
        %980 = vmatpush1.msra.mxu0 0.0
        %981 = vmatprep.subr.mxu0 0.0
        %982 = vmatpush1.msra.mxu0 0.0
        %983 = vmatprep.subr.mxu0 0.0
        %984 = vmatpush1.msra.mxu0 0.0
        %985 = vmatprep.subr.mxu0 0.0
        %986 = vmatpush1.msra.mxu0 0.0
        %987 = vmatprep.subr.mxu0 0.0
        %988 = vmatpush1.msra.mxu0 0.0
        %989 = vmatprep.subr.mxu0 0.0
        %990 = vmatpush1.msra.mxu0 0.0
        %991 = vmatprep.subr.mxu0 0.0
        %992 = vmatpush1.msra.mxu0 0.0
        %993 = vmatprep.subr.mxu0 0.0
        %994 = vmatpush1.msra.mxu0 0.0
        %995 = vmatprep.subr.mxu0 0.0
        %996 = vmatpush1.msra.mxu0 0.0
        %997 = vmatprep.subr.mxu0 0.0
        %998 = vmatpush1.msra.mxu0 0.0
        %999 = vmatprep.subr.mxu0 0.0
        %1000 = vmatpush1.msra.mxu0 0.0
        %1001 = vmatprep.subr.mxu0 0.0
        %1002 = vmatpush1.msra.mxu0 0.0
        %1003 = vmatprep.subr.mxu0 0.0
        %1004 = vmatpush1.msra.mxu0 0.0
        %1005 = vmatprep.mubr.f32.mxu0 0.0
        %1006 = vmatmul.mubr.f32.gmra.mrb[0].mxu0 %v939
        %v1007 = vpop.f32.mrb[0].mxu0
        %v1008 = vadd.f32 0.0, %v1007
        %v1009 = vpop.f32.mrb[0].mxu0
        %1010 = vdwg.mxu0
        %1011 = vrot.lane.b32.xlu0 %v842, 120
        %v1012 = vpop.permute.xlu0 %1011
        %1013 = vrot.lane.b32.xlu0 %v842, 88
        %v1014 = vpop.permute.xlu0 %1013
        %v1015 = vsel %vm848, %v1012, 0
        %v1017 = vsel %vm848, %v1014, 0
        %1019 = vmatprep.subr.mxu0 0.0
        %1020 = vmatpush1.xpose.msra.mxu0 %v1017
        %1021 = vmatprep.subr.mxu0 0.0
        %1022 = vmatpush1.xpose.msra.mxu0 0.0
        %1023 = vmatprep.subr.mxu0 0.0
        %1024 = vmatpush1.xpose.msra.mxu0 0.0
        %1025 = vmatprep.subr.mxu0 0.0
        %1026 = vmatpush1.xpose.msra.mxu0 0.0
        %1027 = vmatprep.subr.mxu0 0.0
        %1028 = vmatpush1.xpose.msra.mxu0 0.0
        %1029 = vmatprep.subr.mxu0 0.0
        %1030 = vmatpush1.xpose.msra.mxu0 0.0
        %1031 = vmatprep.subr.mxu0 0.0
        %1032 = vmatpush1.xpose.msra.mxu0 0.0
        %1033 = vmatprep.subr.mxu0 0.0
        %1034 = vmatpush1.xpose.msra.mxu0 0.0
        %1035 = vmatprep.subr.mxu0 0.0
        %1036 = vmatpush1.xpose.msra.mxu0 0.0
        %1037 = vmatprep.subr.mxu0 0.0
        %1038 = vmatpush1.xpose.msra.mxu0 0.0
        %1039 = vmatprep.subr.mxu0 0.0
        %1040 = vmatpush1.xpose.msra.mxu0 0.0
        %1041 = vmatprep.subr.mxu0 0.0
        %1042 = vmatpush1.xpose.msra.mxu0 0.0
        %1043 = vmatprep.subr.mxu0 0.0
        %1044 = vmatpush1.xpose.msra.mxu0 0.0
        %1045 = vmatprep.subr.mxu0 0.0
        %1046 = vmatpush1.xpose.msra.mxu0 0.0
        %1047 = vmatprep.subr.mxu0 0.0
        %1048 = vmatpush1.xpose.msra.mxu0 0.0
        %1049 = vmatprep.subr.mxu0 0.0
        %1050 = vmatpush1.xpose.msra.mxu0 0.0
        %1051 = vmatprep.subr.mxu0 0.0
        %1052 = vmatpush1.xpose.msra.mxu0 0.0
        %1053 = vmatprep.subr.mxu0 0.0
        %1054 = vmatpush1.xpose.msra.mxu0 0.0
        %1055 = vmatprep.subr.mxu0 0.0
        %1056 = vmatpush1.xpose.msra.mxu0 0.0
        %1057 = vmatprep.subr.mxu0 0.0
        %1058 = vmatpush1.xpose.msra.mxu0 0.0
        %1059 = vmatprep.subr.mxu0 0.0
        %1060 = vmatpush1.xpose.msra.mxu0 0.0
        %1061 = vmatprep.subr.mxu0 0.0
        %1062 = vmatpush1.xpose.msra.mxu0 0.0
        %1063 = vmatprep.subr.mxu0 0.0
        %1064 = vmatpush1.xpose.msra.mxu0 0.0
        %1065 = vmatprep.subr.mxu0 0.0
        %1066 = vmatpush1.xpose.msra.mxu0 0.0
        %1067 = vmatprep.subr.mxu0 0.0
        %1068 = vmatpush1.xpose.msra.mxu0 0.0
        %1069 = vmatprep.subr.mxu0 0.0
        %1070 = vmatpush1.xpose.msra.mxu0 0.0
        %1071 = vmatprep.subr.mxu0 0.0
        %1072 = vmatpush1.xpose.msra.mxu0 0.0
        %1073 = vmatprep.subr.mxu0 0.0
        %1074 = vmatpush1.xpose.msra.mxu0 0.0
        %1075 = vmatprep.subr.mxu0 0.0
        %1076 = vmatpush1.xpose.msra.mxu0 0.0
        %1077 = vmatprep.subr.mxu0 0.0
        %1078 = vmatpush1.xpose.msra.mxu0 0.0
        %1079 = vmatprep.subr.mxu0 0.0
        %1080 = vmatpush1.xpose.msra.mxu0 0.0
        %1081 = vmatprep.subr.mxu0 0.0
        %1082 = vmatpush1.xpose.msra.mxu0 0.0
        %1083 = vmatprep.mubr.f32.mxu0 0.0
        %1084 = vmatmul.mubr.f32.gmra.mrb[0].mxu0 %v1015
        %v1085 = vpop.f32.mrb[0].mxu0
        %v1086 = vadd.f32 0.0, %v1085
        %v1087 = vpop.f32.mrb[0].mxu0
        %1088 = vdwg.mxu0
        %v1089 = vmul.f32 %v1086, 0.35355338
        %v1090 = vsel %vm848, %v1089, -inf
        %1091 = vmax.xlane.f32.xlu0 %v1090
        %v1092 = vpop.xlane.xlu0 %1091
        %v1093 = vsub.f32 %v1089, %v1092
        %v1094 = vmul.f32 %v1093, 1.442695
        %v1095 = vpow.pop %v1094
        %v1096 = vsel %vm848, %v1095, 0.0
        %1097 = vadd.xlane.f32.xlu0 %v1096
        %v1098 = vpop.xlane.xlu0 %1097
        %v1099 = vrcp.pop %v1098
        %v1100 = vmul.f32 %v1095, %v1099
        %1101 = vrot.lane.b32.xlu0 %v842, 56
        %v1102 = vpop.permute.xlu0 %1101
        %v1105 = vsel %vm848, %v1100, 0
        %1107 = vmatprep.subr.mxu0 0.0
        %1108 = vmatpush1.msra.mxu0 %v1102
        %1109 = vmatprep.subr.mxu0 0.0
        %1110 = vmatpush1.msra.mxu0 0.0
        %1111 = vmatprep.subr.mxu0 0.0
        %1112 = vmatpush1.msra.mxu0 0.0
        %1113 = vmatprep.subr.mxu0 0.0
        %1114 = vmatpush1.msra.mxu0 0.0
        %1115 = vmatprep.subr.mxu0 0.0
        %1116 = vmatpush1.msra.mxu0 0.0
        %1117 = vmatprep.subr.mxu0 0.0
        %1118 = vmatpush1.msra.mxu0 0.0
        %1119 = vmatprep.subr.mxu0 0.0
        %1120 = vmatpush1.msra.mxu0 0.0
        %1121 = vmatprep.subr.mxu0 0.0
        %1122 = vmatpush1.msra.mxu0 0.0
        %1123 = vmatprep.subr.mxu0 0.0
        %1124 = vmatpush1.msra.mxu0 0.0
        %1125 = vmatprep.subr.mxu0 0.0
        %1126 = vmatpush1.msra.mxu0 0.0
        %1127 = vmatprep.subr.mxu0 0.0
        %1128 = vmatpush1.msra.mxu0 0.0
        %1129 = vmatprep.subr.mxu0 0.0
        %1130 = vmatpush1.msra.mxu0 0.0
        %1131 = vmatprep.subr.mxu0 0.0
        %1132 = vmatpush1.msra.mxu0 0.0
        %1133 = vmatprep.subr.mxu0 0.0
        %1134 = vmatpush1.msra.mxu0 0.0
        %1135 = vmatprep.subr.mxu0 0.0
        %1136 = vmatpush1.msra.mxu0 0.0
        %1137 = vmatprep.subr.mxu0 0.0
        %1138 = vmatpush1.msra.mxu0 0.0
        %1139 = vmatprep.subr.mxu0 0.0
        %1140 = vmatpush1.msra.mxu0 0.0
        %1141 = vmatprep.subr.mxu0 0.0
        %1142 = vmatpush1.msra.mxu0 0.0
        %1143 = vmatprep.subr.mxu0 0.0
        %1144 = vmatpush1.msra.mxu0 0.0
        %1145 = vmatprep.subr.mxu0 0.0
        %1146 = vmatpush1.msra.mxu0 0.0
        %1147 = vmatprep.subr.mxu0 0.0
        %1148 = vmatpush1.msra.mxu0 0.0
        %1149 = vmatprep.subr.mxu0 0.0
        %1150 = vmatpush1.msra.mxu0 0.0
        %1151 = vmatprep.subr.mxu0 0.0
        %1152 = vmatpush1.msra.mxu0 0.0
        %1153 = vmatprep.subr.mxu0 0.0
        %1154 = vmatpush1.msra.mxu0 0.0
        %1155 = vmatprep.subr.mxu0 0.0
        %1156 = vmatpush1.msra.mxu0 0.0
        %1157 = vmatprep.subr.mxu0 0.0
        %1158 = vmatpush1.msra.mxu0 0.0
        %1159 = vmatprep.subr.mxu0 0.0
        %1160 = vmatpush1.msra.mxu0 0.0
        %1161 = vmatprep.subr.mxu0 0.0
        %1162 = vmatpush1.msra.mxu0 0.0
        %1163 = vmatprep.subr.mxu0 0.0
        %1164 = vmatpush1.msra.mxu0 0.0
        %1165 = vmatprep.subr.mxu0 0.0
        %1166 = vmatpush1.msra.mxu0 0.0
        %1167 = vmatprep.subr.mxu0 0.0
        %1168 = vmatpush1.msra.mxu0 0.0
        %1169 = vmatprep.subr.mxu0 0.0
        %1170 = vmatpush1.msra.mxu0 0.0
        %1171 = vmatprep.mubr.f32.mxu0 0.0
        %1172 = vmatmul.mubr.f32.gmra.mrb[0].mxu0 %v1105
        %v1173 = vpop.f32.mrb[0].mxu0
        %v1174 = vadd.f32 0.0, %v1173
        %v1175 = vpop.f32.mrb[0].mxu0
        %1176 = vdwg.mxu0
        %1177 = vrot.lane.b32.xlu0 %v842, 112
        %v1178 = vpop.permute.xlu0 %1177
        %1179 = vrot.lane.b32.xlu0 %v842, 80
        %v1180 = vpop.permute.xlu0 %1179
        %v1181 = vsel %vm848, %v1178, 0
        %v1183 = vsel %vm848, %v1180, 0
        %1185 = vmatprep.subr.mxu0 0.0
        %1186 = vmatpush1.xpose.msra.mxu0 %v1183
        %1187 = vmatprep.subr.mxu0 0.0
        %1188 = vmatpush1.xpose.msra.mxu0 0.0
        %1189 = vmatprep.subr.mxu0 0.0
        %1190 = vmatpush1.xpose.msra.mxu0 0.0
        %1191 = vmatprep.subr.mxu0 0.0
        %1192 = vmatpush1.xpose.msra.mxu0 0.0
        %1193 = vmatprep.subr.mxu0 0.0
        %1194 = vmatpush1.xpose.msra.mxu0 0.0
        %1195 = vmatprep.subr.mxu0 0.0
        %1196 = vmatpush1.xpose.msra.mxu0 0.0
        %1197 = vmatprep.subr.mxu0 0.0
        %1198 = vmatpush1.xpose.msra.mxu0 0.0
        %1199 = vmatprep.subr.mxu0 0.0
        %1200 = vmatpush1.xpose.msra.mxu0 0.0
        %1201 = vmatprep.subr.mxu0 0.0
        %1202 = vmatpush1.xpose.msra.mxu0 0.0
        %1203 = vmatprep.subr.mxu0 0.0
        %1204 = vmatpush1.xpose.msra.mxu0 0.0
        %1205 = vmatprep.subr.mxu0 0.0
        %1206 = vmatpush1.xpose.msra.mxu0 0.0
        %1207 = vmatprep.subr.mxu0 0.0
        %1208 = vmatpush1.xpose.msra.mxu0 0.0
        %1209 = vmatprep.subr.mxu0 0.0
        %1210 = vmatpush1.xpose.msra.mxu0 0.0
        %1211 = vmatprep.subr.mxu0 0.0
        %1212 = vmatpush1.xpose.msra.mxu0 0.0
        %1213 = vmatprep.subr.mxu0 0.0
        %1214 = vmatpush1.xpose.msra.mxu0 0.0
        %1215 = vmatprep.subr.mxu0 0.0
        %1216 = vmatpush1.xpose.msra.mxu0 0.0
        %1217 = vmatprep.subr.mxu0 0.0
        %1218 = vmatpush1.xpose.msra.mxu0 0.0
        %1219 = vmatprep.subr.mxu0 0.0
        %1220 = vmatpush1.xpose.msra.mxu0 0.0
        %1221 = vmatprep.subr.mxu0 0.0
        %1222 = vmatpush1.xpose.msra.mxu0 0.0
        %1223 = vmatprep.subr.mxu0 0.0
        %1224 = vmatpush1.xpose.msra.mxu0 0.0
        %1225 = vmatprep.subr.mxu0 0.0
        %1226 = vmatpush1.xpose.msra.mxu0 0.0
        %1227 = vmatprep.subr.mxu0 0.0
        %1228 = vmatpush1.xpose.msra.mxu0 0.0
        %1229 = vmatprep.subr.mxu0 0.0
        %1230 = vmatpush1.xpose.msra.mxu0 0.0
        %1231 = vmatprep.subr.mxu0 0.0
        %1232 = vmatpush1.xpose.msra.mxu0 0.0
        %1233 = vmatprep.subr.mxu0 0.0
        %1234 = vmatpush1.xpose.msra.mxu0 0.0
        %1235 = vmatprep.subr.mxu0 0.0
        %1236 = vmatpush1.xpose.msra.mxu0 0.0
        %1237 = vmatprep.subr.mxu0 0.0
        %1238 = vmatpush1.xpose.msra.mxu0 0.0
        %1239 = vmatprep.subr.mxu0 0.0
        %1240 = vmatpush1.xpose.msra.mxu0 0.0
        %1241 = vmatprep.subr.mxu0 0.0
        %1242 = vmatpush1.xpose.msra.mxu0 0.0
        %1243 = vmatprep.subr.mxu0 0.0
        %1244 = vmatpush1.xpose.msra.mxu0 0.0
        %1245 = vmatprep.subr.mxu0 0.0
        %1246 = vmatpush1.xpose.msra.mxu0 0.0
        %1247 = vmatprep.subr.mxu0 0.0
        %1248 = vmatpush1.xpose.msra.mxu0 0.0
        %1249 = vmatprep.mubr.f32.mxu0 0.0
        %1250 = vmatmul.mubr.f32.gmra.mrb[0].mxu0 %v1181
        %v1251 = vpop.f32.mrb[0].mxu0
        %v1252 = vadd.f32 0.0, %v1251
        %v1253 = vpop.f32.mrb[0].mxu0
        %1254 = vdwg.mxu0
        %v1255 = vmul.f32 %v1252, 0.35355338
        %v1256 = vsel %vm848, %v1255, -inf
        %1257 = vmax.xlane.f32.xlu0 %v1256
        %v1258 = vpop.xlane.xlu0 %1257
        %v1259 = vsub.f32 %v1255, %v1258
        %v1260 = vmul.f32 %v1259, 1.442695
        %v1261 = vpow.pop %v1260
        %v1262 = vsel %vm848, %v1261, 0.0
        %1263 = vadd.xlane.f32.xlu0 %v1262
        %v1264 = vpop.xlane.xlu0 %1263
        %v1265 = vrcp.pop %v1264
        %v1266 = vmul.f32 %v1261, %v1265
        %1267 = vrot.lane.b32.xlu0 %v842, 48
        %v1268 = vpop.permute.xlu0 %1267
        %v1271 = vsel %vm848, %v1266, 0
        %1273 = vmatprep.subr.mxu0 0.0
        %1274 = vmatpush1.msra.mxu0 %v1268
        %1275 = vmatprep.subr.mxu0 0.0
        %1276 = vmatpush1.msra.mxu0 0.0
        %1277 = vmatprep.subr.mxu0 0.0
        %1278 = vmatpush1.msra.mxu0 0.0
        %1279 = vmatprep.subr.mxu0 0.0
        %1280 = vmatpush1.msra.mxu0 0.0
        %1281 = vmatprep.subr.mxu0 0.0
        %1282 = vmatpush1.msra.mxu0 0.0
        %1283 = vmatprep.subr.mxu0 0.0
        %1284 = vmatpush1.msra.mxu0 0.0
        %1285 = vmatprep.subr.mxu0 0.0
        %1286 = vmatpush1.msra.mxu0 0.0
        %1287 = vmatprep.subr.mxu0 0.0
        %1288 = vmatpush1.msra.mxu0 0.0
        %1289 = vmatprep.subr.mxu0 0.0
        %1290 = vmatpush1.msra.mxu0 0.0
        %1291 = vmatprep.subr.mxu0 0.0
        %1292 = vmatpush1.msra.mxu0 0.0
        %1293 = vmatprep.subr.mxu0 0.0
        %1294 = vmatpush1.msra.mxu0 0.0
        %1295 = vmatprep.subr.mxu0 0.0
        %1296 = vmatpush1.msra.mxu0 0.0
        %1297 = vmatprep.subr.mxu0 0.0
        %1298 = vmatpush1.msra.mxu0 0.0
        %1299 = vmatprep.subr.mxu0 0.0
        %1300 = vmatpush1.msra.mxu0 0.0
        %1301 = vmatprep.subr.mxu0 0.0
        %1302 = vmatpush1.msra.mxu0 0.0
        %1303 = vmatprep.subr.mxu0 0.0
        %1304 = vmatpush1.msra.mxu0 0.0
        %1305 = vmatprep.subr.mxu0 0.0
        %1306 = vmatpush1.msra.mxu0 0.0
        %1307 = vmatprep.subr.mxu0 0.0
        %1308 = vmatpush1.msra.mxu0 0.0
        %1309 = vmatprep.subr.mxu0 0.0
        %1310 = vmatpush1.msra.mxu0 0.0
        %1311 = vmatprep.subr.mxu0 0.0
        %1312 = vmatpush1.msra.mxu0 0.0
        %1313 = vmatprep.subr.mxu0 0.0
        %1314 = vmatpush1.msra.mxu0 0.0
        %1315 = vmatprep.subr.mxu0 0.0
        %1316 = vmatpush1.msra.mxu0 0.0
        %1317 = vmatprep.subr.mxu0 0.0
        %1318 = vmatpush1.msra.mxu0 0.0
        %1319 = vmatprep.subr.mxu0 0.0
        %1320 = vmatpush1.msra.mxu0 0.0
        %1321 = vmatprep.subr.mxu0 0.0
        %1322 = vmatpush1.msra.mxu0 0.0
        %1323 = vmatprep.subr.mxu0 0.0
        %1324 = vmatpush1.msra.mxu0 0.0
        %1325 = vmatprep.subr.mxu0 0.0
        %1326 = vmatpush1.msra.mxu0 0.0
        %1327 = vmatprep.subr.mxu0 0.0
        %1328 = vmatpush1.msra.mxu0 0.0
        %1329 = vmatprep.subr.mxu0 0.0
        %1330 = vmatpush1.msra.mxu0 0.0
        %1331 = vmatprep.subr.mxu0 0.0
        %1332 = vmatpush1.msra.mxu0 0.0
        %1333 = vmatprep.subr.mxu0 0.0
        %1334 = vmatpush1.msra.mxu0 0.0
        %1335 = vmatprep.subr.mxu0 0.0
        %1336 = vmatpush1.msra.mxu0 0.0
        %1337 = vmatprep.mubr.f32.mxu0 0.0
        %1338 = vmatmul.mubr.f32.gmra.mrb[0].mxu0 %v1271
        %v1339 = vpop.f32.mrb[0].mxu0
        %v1340 = vadd.f32 0.0, %v1339
        %v1341 = vpop.f32.mrb[0].mxu0
        %1342 = vdwg.mxu0
        %1343 = vrot.lane.b32.xlu0 %v842, 104
        %v1344 = vpop.permute.xlu0 %1343
        %1345 = vrot.lane.b32.xlu0 %v842, 72
        %v1346 = vpop.permute.xlu0 %1345
        %v1347 = vsel %vm848, %v1344, 0
        %v1349 = vsel %vm848, %v1346, 0
        %1351 = vmatprep.subr.mxu0 0.0
        %1352 = vmatpush1.xpose.msra.mxu0 %v1349
        %1353 = vmatprep.subr.mxu0 0.0
        %1354 = vmatpush1.xpose.msra.mxu0 0.0
        %1355 = vmatprep.subr.mxu0 0.0
        %1356 = vmatpush1.xpose.msra.mxu0 0.0
        %1357 = vmatprep.subr.mxu0 0.0
        %1358 = vmatpush1.xpose.msra.mxu0 0.0
        %1359 = vmatprep.subr.mxu0 0.0
        %1360 = vmatpush1.xpose.msra.mxu0 0.0
        %1361 = vmatprep.subr.mxu0 0.0
        %1362 = vmatpush1.xpose.msra.mxu0 0.0
        %1363 = vmatprep.subr.mxu0 0.0
        %1364 = vmatpush1.xpose.msra.mxu0 0.0
        %1365 = vmatprep.subr.mxu0 0.0
        %1366 = vmatpush1.xpose.msra.mxu0 0.0
        %1367 = vmatprep.subr.mxu0 0.0
        %1368 = vmatpush1.xpose.msra.mxu0 0.0
        %1369 = vmatprep.subr.mxu0 0.0
        %1370 = vmatpush1.xpose.msra.mxu0 0.0
        %1371 = vmatprep.subr.mxu0 0.0
        %1372 = vmatpush1.xpose.msra.mxu0 0.0
        %1373 = vmatprep.subr.mxu0 0.0
        %1374 = vmatpush1.xpose.msra.mxu0 0.0
        %1375 = vmatprep.subr.mxu0 0.0
        %1376 = vmatpush1.xpose.msra.mxu0 0.0
        %1377 = vmatprep.subr.mxu0 0.0
        %1378 = vmatpush1.xpose.msra.mxu0 0.0
        %1379 = vmatprep.subr.mxu0 0.0
        %1380 = vmatpush1.xpose.msra.mxu0 0.0
        %1381 = vmatprep.subr.mxu0 0.0
        %1382 = vmatpush1.xpose.msra.mxu0 0.0
        %1383 = vmatprep.subr.mxu0 0.0
        %1384 = vmatpush1.xpose.msra.mxu0 0.0
        %1385 = vmatprep.subr.mxu0 0.0
        %1386 = vmatpush1.xpose.msra.mxu0 0.0
        %1387 = vmatprep.subr.mxu0 0.0
        %1388 = vmatpush1.xpose.msra.mxu0 0.0
        %1389 = vmatprep.subr.mxu0 0.0
        %1390 = vmatpush1.xpose.msra.mxu0 0.0
        %1391 = vmatprep.subr.mxu0 0.0
        %1392 = vmatpush1.xpose.msra.mxu0 0.0
        %1393 = vmatprep.subr.mxu0 0.0
        %1394 = vmatpush1.xpose.msra.mxu0 0.0
        %1395 = vmatprep.subr.mxu0 0.0
        %1396 = vmatpush1.xpose.msra.mxu0 0.0
        %1397 = vmatprep.subr.mxu0 0.0
        %1398 = vmatpush1.xpose.msra.mxu0 0.0
        %1399 = vmatprep.subr.mxu0 0.0
        %1400 = vmatpush1.xpose.msra.mxu0 0.0
        %1401 = vmatprep.subr.mxu0 0.0
        %1402 = vmatpush1.xpose.msra.mxu0 0.0
        %1403 = vmatprep.subr.mxu0 0.0
        %1404 = vmatpush1.xpose.msra.mxu0 0.0
        %1405 = vmatprep.subr.mxu0 0.0
        %1406 = vmatpush1.xpose.msra.mxu0 0.0
        %1407 = vmatprep.subr.mxu0 0.0
        %1408 = vmatpush1.xpose.msra.mxu0 0.0
        %1409 = vmatprep.subr.mxu0 0.0
        %1410 = vmatpush1.xpose.msra.mxu0 0.0
        %1411 = vmatprep.subr.mxu0 0.0
        %1412 = vmatpush1.xpose.msra.mxu0 0.0
        %1413 = vmatprep.subr.mxu0 0.0
        %1414 = vmatpush1.xpose.msra.mxu0 0.0
        %1415 = vmatprep.mubr.f32.mxu0 0.0
        %1416 = vmatmul.mubr.f32.gmra.mrb[0].mxu0 %v1347
        %v1417 = vpop.f32.mrb[0].mxu0
        %v1418 = vadd.f32 0.0, %v1417
        %v1419 = vpop.f32.mrb[0].mxu0
        %1420 = vdwg.mxu0
        %v1421 = vmul.f32 %v1418, 0.35355338
        %v1422 = vsel %vm848, %v1421, -inf
        %1423 = vmax.xlane.f32.xlu0 %v1422
        %v1424 = vpop.xlane.xlu0 %1423
        %v1425 = vsub.f32 %v1421, %v1424
        %v1426 = vmul.f32 %v1425, 1.442695
        %v1427 = vpow.pop %v1426
        %v1428 = vsel %vm848, %v1427, 0.0
        %1429 = vadd.xlane.f32.xlu0 %v1428
        %v1430 = vpop.xlane.xlu0 %1429
        %v1431 = vrcp.pop %v1430
        %v1432 = vmul.f32 %v1427, %v1431
        %1433 = vrot.lane.b32.xlu0 %v842, 40
        %v1434 = vpop.permute.xlu0 %1433
        %v1437 = vsel %vm848, %v1432, 0
        %1439 = vmatprep.subr.mxu0 0.0
        %1440 = vmatpush1.msra.mxu0 %v1434
        %1441 = vmatprep.subr.mxu0 0.0
        %1442 = vmatpush1.msra.mxu0 0.0
        %1443 = vmatprep.subr.mxu0 0.0
        %1444 = vmatpush1.msra.mxu0 0.0
        %1445 = vmatprep.subr.mxu0 0.0
        %1446 = vmatpush1.msra.mxu0 0.0
        %1447 = vmatprep.subr.mxu0 0.0
        %1448 = vmatpush1.msra.mxu0 0.0
        %1449 = vmatprep.subr.mxu0 0.0
        %1450 = vmatpush1.msra.mxu0 0.0
        %1451 = vmatprep.subr.mxu0 0.0
        %1452 = vmatpush1.msra.mxu0 0.0
        %1453 = vmatprep.subr.mxu0 0.0
        %1454 = vmatpush1.msra.mxu0 0.0
        %1455 = vmatprep.subr.mxu0 0.0
        %1456 = vmatpush1.msra.mxu0 0.0
        %1457 = vmatprep.subr.mxu0 0.0
        %1458 = vmatpush1.msra.mxu0 0.0
        %1459 = vmatprep.subr.mxu0 0.0
        %1460 = vmatpush1.msra.mxu0 0.0
        %1461 = vmatprep.subr.mxu0 0.0
        %1462 = vmatpush1.msra.mxu0 0.0
        %1463 = vmatprep.subr.mxu0 0.0
        %1464 = vmatpush1.msra.mxu0 0.0
        %1465 = vmatprep.subr.mxu0 0.0
        %1466 = vmatpush1.msra.mxu0 0.0
        %1467 = vmatprep.subr.mxu0 0.0
        %1468 = vmatpush1.msra.mxu0 0.0
        %1469 = vmatprep.subr.mxu0 0.0
        %1470 = vmatpush1.msra.mxu0 0.0
        %1471 = vmatprep.subr.mxu0 0.0
        %1472 = vmatpush1.msra.mxu0 0.0
        %1473 = vmatprep.subr.mxu0 0.0
        %1474 = vmatpush1.msra.mxu0 0.0
        %1475 = vmatprep.subr.mxu0 0.0
        %1476 = vmatpush1.msra.mxu0 0.0
        %1477 = vmatprep.subr.mxu0 0.0
        %1478 = vmatpush1.msra.mxu0 0.0
        %1479 = vmatprep.subr.mxu0 0.0
        %1480 = vmatpush1.msra.mxu0 0.0
        %1481 = vmatprep.subr.mxu0 0.0
        %1482 = vmatpush1.msra.mxu0 0.0
        %1483 = vmatprep.subr.mxu0 0.0
        %1484 = vmatpush1.msra.mxu0 0.0
        %1485 = vmatprep.subr.mxu0 0.0
        %1486 = vmatpush1.msra.mxu0 0.0
        %1487 = vmatprep.subr.mxu0 0.0
        %1488 = vmatpush1.msra.mxu0 0.0
        %1489 = vmatprep.subr.mxu0 0.0
        %1490 = vmatpush1.msra.mxu0 0.0
        %1491 = vmatprep.subr.mxu0 0.0
        %1492 = vmatpush1.msra.mxu0 0.0
        %1493 = vmatprep.subr.mxu0 0.0
        %1494 = vmatpush1.msra.mxu0 0.0
        %1495 = vmatprep.subr.mxu0 0.0
        %1496 = vmatpush1.msra.mxu0 0.0
        %1497 = vmatprep.subr.mxu0 0.0
        %1498 = vmatpush1.msra.mxu0 0.0
        %1499 = vmatprep.subr.mxu0 0.0
        %1500 = vmatpush1.msra.mxu0 0.0
        %1501 = vmatprep.subr.mxu0 0.0
        %1502 = vmatpush1.msra.mxu0 0.0
        %1503 = vmatprep.mubr.f32.mxu0 0.0
        %1504 = vmatmul.mubr.f32.gmra.mrb[0].mxu0 %v1437
        %v1505 = vpop.f32.mrb[0].mxu0
        %v1506 = vadd.f32 0.0, %v1505
        %v1507 = vpop.f32.mrb[0].mxu0
        %1508 = vdwg.mxu0
        %1510 = vrot.lane.b32.xlu0 %v1174, 8
        %v1511 = vpop.permute.xlu0 %1510
        %1514 = vrot.lane.b32.xlu0 %v1340, 16
        %v1515 = vpop.permute.xlu0 %1514
        %1518 = vrot.lane.b32.xlu0 %v1506, 24
        %v1519 = vpop.permute.xlu0 %1518
        %v1521 = vsel %vm848, %v1008, %v1511
        %v1522 = vsel %vm686, %v1521, %v1515
        %vm1523 = vcmask 195584
        %v1524 = vsel %vm1523, %v1522, %v1519
        %v1525 = vld [vmem:[#allocation8] sm:$0xff]
        %v1526 = vld [vmem:[#allocation8 + $0x8] sm:$0xff]
        %v1527 = vld [vmem:[#allocation8 + $0x10] sm:$0xff]
        %v1528 = vld [vmem:[#allocation8 + $0x18] sm:$0xff]
        %v1529 = vld [vmem:[#allocation10] sm:$0x1]
        %v1531 = vlaneseq
        %v1532 = vshrl.u32 %v1531, 7
        %v1533 = vsub.s32 0, %v1532
        %v1534 = vrot.slane %v1529, %v1533
        %v1537 = vsel %vm771, %v1524, 0
        %1539 = vmatprep.subr.mxu0 0.0
        %1540 = vmatpush1.msra.mxu0 %v1525
        %1541 = vmatprep.subr.mxu0 0.0
        %1542 = vmatpush1.msra.mxu0 %v1526
        %1543 = vmatprep.subr.mxu0 0.0
        %1544 = vmatpush1.msra.mxu0 %v1527
        %1545 = vmatprep.subr.mxu0 0.0
        %1546 = vmatpush1.msra.mxu0 %v1528
        %1547 = vmatprep.subr.mxu0 0.0
        %1548 = vmatpush1.msra.mxu0 0.0
        %1549 = vmatprep.subr.mxu0 0.0
        %1550 = vmatpush1.msra.mxu0 0.0
        %1551 = vmatprep.subr.mxu0 0.0
        %1552 = vmatpush1.msra.mxu0 0.0
        %1553 = vmatprep.subr.mxu0 0.0
        %1554 = vmatpush1.msra.mxu0 0.0
        %1555 = vmatprep.subr.mxu0 0.0
        %1556 = vmatpush1.msra.mxu0 0.0
        %1557 = vmatprep.subr.mxu0 0.0
        %1558 = vmatpush1.msra.mxu0 0.0
        %1559 = vmatprep.subr.mxu0 0.0
        %1560 = vmatpush1.msra.mxu0 0.0
        %1561 = vmatprep.subr.mxu0 0.0
        %1562 = vmatpush1.msra.mxu0 0.0
        %1563 = vmatprep.subr.mxu0 0.0
        %1564 = vmatpush1.msra.mxu0 0.0
        %1565 = vmatprep.subr.mxu0 0.0
        %1566 = vmatpush1.msra.mxu0 0.0
        %1567 = vmatprep.subr.mxu0 0.0
        %1568 = vmatpush1.msra.mxu0 0.0
        %1569 = vmatprep.subr.mxu0 0.0
        %1570 = vmatpush1.msra.mxu0 0.0
        %1571 = vmatprep.subr.mxu0 0.0
        %1572 = vmatpush1.msra.mxu0 0.0
        %1573 = vmatprep.subr.mxu0 0.0
        %1574 = vmatpush1.msra.mxu0 0.0
        %1575 = vmatprep.subr.mxu0 0.0
        %1576 = vmatpush1.msra.mxu0 0.0
        %1577 = vmatprep.subr.mxu0 0.0
        %1578 = vmatpush1.msra.mxu0 0.0
        %1579 = vmatprep.subr.mxu0 0.0
        %1580 = vmatpush1.msra.mxu0 0.0
        %1581 = vmatprep.subr.mxu0 0.0
        %1582 = vmatpush1.msra.mxu0 0.0
        %1583 = vmatprep.subr.mxu0 0.0
        %1584 = vmatpush1.msra.mxu0 0.0
        %1585 = vmatprep.subr.mxu0 0.0
        %1586 = vmatpush1.msra.mxu0 0.0
        %1587 = vmatprep.subr.mxu0 0.0
        %1588 = vmatpush1.msra.mxu0 0.0
        %1589 = vmatprep.subr.mxu0 0.0
        %1590 = vmatpush1.msra.mxu0 0.0
        %1591 = vmatprep.subr.mxu0 0.0
        %1592 = vmatpush1.msra.mxu0 0.0
        %1593 = vmatprep.subr.mxu0 0.0
        %1594 = vmatpush1.msra.mxu0 0.0
        %1595 = vmatprep.subr.mxu0 0.0
        %1596 = vmatpush1.msra.mxu0 0.0
        %1597 = vmatprep.subr.mxu0 0.0
        %1598 = vmatpush1.msra.mxu0 0.0
        %1599 = vmatprep.subr.mxu0 0.0
        %1600 = vmatpush1.msra.mxu0 0.0
        %1601 = vmatprep.subr.mxu0 0.0
        %1602 = vmatpush1.msra.mxu0 0.0
        %1603 = vmatprep.mubr.f32.mxu0 0.0
        %1604 = vmatmul.mubr.f32.gmra.mrb[0].mxu0 %v1537
        %v1605 = vpop.f32.mrb[0].mxu0
        %v1606 = vadd.f32 %v1534, %v1605
        %v1607 = vpop.f32.mrb[0].mxu0
        %1608 = vdwg.mxu0
        %v1609 = vadd.f32 %v757, %v1606
        %v1610 = vld [vmem:[#allocation11] sm:$0x1]
        %v1611 = vld [vmem:[#allocation13] sm:$0x1]
        %v1612 = vsel %vm771, %v1609, 0.0
        %1613 = vadd.xlane.f32.xlu0 %v1612
        %v1614 = vpop.xlane.xlu0 %1613
        %v1615 = vrcp.pop 32.0
        %v1616 = vmul.f32 %v1614, %v1615
        %v1617 = vsub.f32 %v1609, %v1616
        %v1618 = vmul.f32 %v1617, %v1617
        %v1619 = vsel %vm771, %v1618, 0.0
        %1620 = vadd.xlane.f32.xlu0 %v1619
        %v1621 = vpop.xlane.xlu0 %1620
        %v1622 = vmul.f32 %v1621, %v1615
        %v1623 = vadd.f32 %v1622, 1e-05
        %v1624 = vrsqrt.pop %v1623
        %v1625 = vmul.f32 %v1617, %v1624
        %v1627 = vlaneseq
        %v1628 = vshrl.u32 %v1627, 7
        %v1629 = vsub.s32 0, %v1628
        %v1630 = vrot.slane %v1610, %v1629
        %v1632 = vmul.f32 %v1625, %v1630
        %v1634 = vlaneseq
        %v1635 = vshrl.u32 %v1634, 7
        %v1636 = vsub.s32 0, %v1635
        %v1637 = vrot.slane %v1611, %v1636
        %v1639 = vadd.f32 %v1632, %v1637
        %v1640 = vld [vmem:[%s9] sm:$0xff]
        %v1641 = vld [vmem:[%s9 + $0x8] sm:$0xff]
        %v1642 = vld [vmem:[%s9 + $0x10] sm:$0xff]
        %v1643 = vld [vmem:[%s9 + $0x18] sm:$0xff]
        %v1644 = vld [vmem:[%s10] sm:$0x1]
        %v1646 = vlaneseq
        %v1647 = vshrl.u32 %v1646, 7
        %v1648 = vsub.s32 0, %v1647
        %v1649 = vrot.slane %v1644, %v1648
        %v1652 = vsel %vm771, %v1639, 0
        %1654 = vmatprep.subr.mxu0 0.0
        %1655 = vmatpush1.msra.mxu0 %v1640
        %1656 = vmatprep.subr.mxu0 0.0
        %1657 = vmatpush1.msra.mxu0 %v1641
        %1658 = vmatprep.subr.mxu0 0.0
        %1659 = vmatpush1.msra.mxu0 %v1642
        %1660 = vmatprep.subr.mxu0 0.0
        %1661 = vmatpush1.msra.mxu0 %v1643
        %1662 = vmatprep.subr.mxu0 0.0
        %1663 = vmatpush1.msra.mxu0 0.0
        %1664 = vmatprep.subr.mxu0 0.0
        %1665 = vmatpush1.msra.mxu0 0.0
        %1666 = vmatprep.subr.mxu0 0.0
        %1667 = vmatpush1.msra.mxu0 0.0
        %1668 = vmatprep.subr.mxu0 0.0
        %1669 = vmatpush1.msra.mxu0 0.0
        %1670 = vmatprep.subr.mxu0 0.0
        %1671 = vmatpush1.msra.mxu0 0.0
        %1672 = vmatprep.subr.mxu0 0.0
        %1673 = vmatpush1.msra.mxu0 0.0
        %1674 = vmatprep.subr.mxu0 0.0
        %1675 = vmatpush1.msra.mxu0 0.0
        %1676 = vmatprep.subr.mxu0 0.0
        %1677 = vmatpush1.msra.mxu0 0.0
        %1678 = vmatprep.subr.mxu0 0.0
        %1679 = vmatpush1.msra.mxu0 0.0
        %1680 = vmatprep.subr.mxu0 0.0
        %1681 = vmatpush1.msra.mxu0 0.0
        %1682 = vmatprep.subr.mxu0 0.0
        %1683 = vmatpush1.msra.mxu0 0.0
        %1684 = vmatprep.subr.mxu0 0.0
        %1685 = vmatpush1.msra.mxu0 0.0
        %1686 = vmatprep.subr.mxu0 0.0
        %1687 = vmatpush1.msra.mxu0 0.0
        %1688 = vmatprep.subr.mxu0 0.0
        %1689 = vmatpush1.msra.mxu0 0.0
        %1690 = vmatprep.subr.mxu0 0.0
        %1691 = vmatpush1.msra.mxu0 0.0
        %1692 = vmatprep.subr.mxu0 0.0
        %1693 = vmatpush1.msra.mxu0 0.0
        %1694 = vmatprep.subr.mxu0 0.0
        %1695 = vmatpush1.msra.mxu0 0.0
        %1696 = vmatprep.subr.mxu0 0.0
        %1697 = vmatpush1.msra.mxu0 0.0
        %1698 = vmatprep.subr.mxu0 0.0
        %1699 = vmatpush1.msra.mxu0 0.0
        %1700 = vmatprep.subr.mxu0 0.0
        %1701 = vmatpush1.msra.mxu0 0.0
        %1702 = vmatprep.subr.mxu0 0.0
        %1703 = vmatpush1.msra.mxu0 0.0
        %1704 = vmatprep.subr.mxu0 0.0
        %1705 = vmatpush1.msra.mxu0 0.0
        %1706 = vmatprep.subr.mxu0 0.0
        %1707 = vmatpush1.msra.mxu0 0.0
        %1708 = vmatprep.subr.mxu0 0.0
        %1709 = vmatpush1.msra.mxu0 0.0
        %1710 = vmatprep.subr.mxu0 0.0
        %1711 = vmatpush1.msra.mxu0 0.0
        %1712 = vmatprep.subr.mxu0 0.0
        %1713 = vmatpush1.msra.mxu0 0.0
        %1714 = vmatprep.subr.mxu0 0.0
        %1715 = vmatpush1.msra.mxu0 0.0
        %1716 = vmatprep.subr.mxu0 0.0
        %1717 = vmatpush1.msra.mxu0 0.0
        %1718 = vmatprep.mubr.f32.mxu0 0.0
        %1719 = vmatmul.mubr.f32.gmra.mrb[0].mxu0 %v1652
        %v1720 = vpop.f32.mrb[0].mxu0
        %v1721 = vadd.f32 %v1649, %v1720
        %v1722 = vpop.f32.mrb[0].mxu0
        %1723 = vdwg.mxu0
        %v1724 = vmax.f32 %v1721, 0.0
        %v1725 = vld [vmem:[#allocation14] sm:$0xff]
        %v1726 = vld [vmem:[#allocation14 + $0x8] sm:$0xff]
        %v1727 = vld [vmem:[#allocation14 + $0x10] sm:$0xff]
        %v1728 = vld [vmem:[#allocation14 + $0x18] sm:$0xff]
        %v1729 = vld [vmem:[%s12] sm:$0x1]
        %v1731 = vlaneseq
        %v1732 = vshrl.u32 %v1731, 7
        %v1733 = vsub.s32 0, %v1732
        %v1734 = vrot.slane %v1729, %v1733
        %v1737 = vsel %vm771, %v1724, 0
        %1739 = vmatprep.subr.mxu0 0.0
        %1740 = vmatpush1.msra.mxu0 %v1725
        %1741 = vmatprep.subr.mxu0 0.0
        %1742 = vmatpush1.msra.mxu0 %v1726
        %1743 = vmatprep.subr.mxu0 0.0
        %1744 = vmatpush1.msra.mxu0 %v1727
        %1745 = vmatprep.subr.mxu0 0.0
        %1746 = vmatpush1.msra.mxu0 %v1728
        %1747 = vmatprep.subr.mxu0 0.0
        %1748 = vmatpush1.msra.mxu0 0.0
        %1749 = vmatprep.subr.mxu0 0.0
        %1750 = vmatpush1.msra.mxu0 0.0
        %1751 = vmatprep.subr.mxu0 0.0
        %1752 = vmatpush1.msra.mxu0 0.0
        %1753 = vmatprep.subr.mxu0 0.0
        %1754 = vmatpush1.msra.mxu0 0.0
        %1755 = vmatprep.subr.mxu0 0.0
        %1756 = vmatpush1.msra.mxu0 0.0
        %1757 = vmatprep.subr.mxu0 0.0
        %1758 = vmatpush1.msra.mxu0 0.0
        %1759 = vmatprep.subr.mxu0 0.0
        %1760 = vmatpush1.msra.mxu0 0.0
        %1761 = vmatprep.subr.mxu0 0.0
        %1762 = vmatpush1.msra.mxu0 0.0
        %1763 = vmatprep.subr.mxu0 0.0
        %1764 = vmatpush1.msra.mxu0 0.0
        %1765 = vmatprep.subr.mxu0 0.0
        %1766 = vmatpush1.msra.mxu0 0.0
        %1767 = vmatprep.subr.mxu0 0.0
        %1768 = vmatpush1.msra.mxu0 0.0
        %1769 = vmatprep.subr.mxu0 0.0
        %1770 = vmatpush1.msra.mxu0 0.0
        %1771 = vmatprep.subr.mxu0 0.0
        %1772 = vmatpush1.msra.mxu0 0.0
        %1773 = vmatprep.subr.mxu0 0.0
        %1774 = vmatpush1.msra.mxu0 0.0
        %1775 = vmatprep.subr.mxu0 0.0
        %1776 = vmatpush1.msra.mxu0 0.0
        %1777 = vmatprep.subr.mxu0 0.0
        %1778 = vmatpush1.msra.mxu0 0.0
        %1779 = vmatprep.subr.mxu0 0.0
        %1780 = vmatpush1.msra.mxu0 0.0
        %1781 = vmatprep.subr.mxu0 0.0
        %1782 = vmatpush1.msra.mxu0 0.0
        %1783 = vmatprep.subr.mxu0 0.0
        %1784 = vmatpush1.msra.mxu0 0.0
        %1785 = vmatprep.subr.mxu0 0.0
        %1786 = vmatpush1.msra.mxu0 0.0
        %1787 = vmatprep.subr.mxu0 0.0
        %1788 = vmatpush1.msra.mxu0 0.0
        %1789 = vmatprep.subr.mxu0 0.0
        %1790 = vmatpush1.msra.mxu0 0.0
        %1791 = vmatprep.subr.mxu0 0.0
        %1792 = vmatpush1.msra.mxu0 0.0
        %1793 = vmatprep.subr.mxu0 0.0
        %1794 = vmatpush1.msra.mxu0 0.0
        %1795 = vmatprep.subr.mxu0 0.0
        %1796 = vmatpush1.msra.mxu0 0.0
        %1797 = vmatprep.subr.mxu0 0.0
        %1798 = vmatpush1.msra.mxu0 0.0
        %1799 = vmatprep.subr.mxu0 0.0
        %1800 = vmatpush1.msra.mxu0 0.0
        %1801 = vmatprep.subr.mxu0 0.0
        %1802 = vmatpush1.msra.mxu0 0.0
        %1803 = vmatprep.mubr.f32.mxu0 0.0
        %1804 = vmatmul.mubr.f32.gmra.mrb[0].mxu0 %v1737
        %v1805 = vpop.f32.mrb[0].mxu0
        %v1806 = vadd.f32 %v1734, %v1805
        %v1807 = vpop.f32.mrb[0].mxu0
        %1808 = vdwg.mxu0
        %v1809 = vadd.f32 %v1639, %v1806
        %v1810 = vld [vmem:[%s13] sm:$0x1]
        %v1811 = vld [vmem:[%s14] sm:$0x1]
        %v1812 = vsel %vm771, %v1809, 0.0
        %1813 = vadd.xlane.f32.xlu0 %v1812
        %v1814 = vpop.xlane.xlu0 %1813
        %v1815 = vmul.f32 %v1814, %v1615
        %v1816 = vsub.f32 %v1809, %v1815
        %v1817 = vmul.f32 %v1816, %v1816
        %v1818 = vsel %vm771, %v1817, 0.0
        %1819 = vadd.xlane.f32.xlu0 %v1818
        %v1820 = vpop.xlane.xlu0 %1819
        %v1821 = vmul.f32 %v1820, %v1615
        %v1822 = vadd.f32 %v1821, 1e-05
        %v1823 = vrsqrt.pop %v1822
        %v1824 = vmul.f32 %v1816, %v1823
        %v1826 = vlaneseq
        %v1827 = vshrl.u32 %v1826, 7
        %v1828 = vsub.s32 0, %v1827
        %v1829 = vrot.slane %v1810, %v1828
        %v1831 = vmul.f32 %v1824, %v1829
        %v1833 = vlaneseq
        %v1834 = vshrl.u32 %v1833, 7
        %v1835 = vsub.s32 0, %v1834
        %v1836 = vrot.slane %v1811, %v1835
        %v1838 = vadd.f32 %v1831, %v1836
        %v1839 = vld [vmem:[#allocation16] sm:$0xff]
        %v1840 = vld [vmem:[#allocation16 + $0x8] sm:$0xff]
        %v1841 = vld [vmem:[#allocation16 + $0x10] sm:$0xff]
        %v1842 = vld [vmem:[#allocation16 + $0x18] sm:$0xff]
        %v1843 = vld [vmem:[%s16] sm:$0x1]
        %v1845 = vlaneseq
        %v1846 = vshrl.u32 %v1845, 7
        %v1847 = vsub.s32 0, %v1846
        %v1848 = vrot.slane %v1843, %v1847
        %v1851 = vsel %vm771, %v1838, 0
        %1853 = vmatprep.subr.mxu0 0.0
        %1854 = vmatpush1.msra.mxu0 %v1839
        %1855 = vmatprep.subr.mxu0 0.0
        %1856 = vmatpush1.msra.mxu0 %v1840
        %1857 = vmatprep.subr.mxu0 0.0
        %1858 = vmatpush1.msra.mxu0 %v1841
        %1859 = vmatprep.subr.mxu0 0.0
        %1860 = vmatpush1.msra.mxu0 %v1842
        %1861 = vmatprep.subr.mxu0 0.0
        %1862 = vmatpush1.msra.mxu0 0.0
        %1863 = vmatprep.subr.mxu0 0.0
        %1864 = vmatpush1.msra.mxu0 0.0
        %1865 = vmatprep.subr.mxu0 0.0
        %1866 = vmatpush1.msra.mxu0 0.0
        %1867 = vmatprep.subr.mxu0 0.0
        %1868 = vmatpush1.msra.mxu0 0.0
        %1869 = vmatprep.subr.mxu0 0.0
        %1870 = vmatpush1.msra.mxu0 0.0
        %1871 = vmatprep.subr.mxu0 0.0
        %1872 = vmatpush1.msra.mxu0 0.0
        %1873 = vmatprep.subr.mxu0 0.0
        %1874 = vmatpush1.msra.mxu0 0.0
        %1875 = vmatprep.subr.mxu0 0.0
        %1876 = vmatpush1.msra.mxu0 0.0
        %1877 = vmatprep.subr.mxu0 0.0
        %1878 = vmatpush1.msra.mxu0 0.0
        %1879 = vmatprep.subr.mxu0 0.0
        %1880 = vmatpush1.msra.mxu0 0.0
        %1881 = vmatprep.subr.mxu0 0.0
        %1882 = vmatpush1.msra.mxu0 0.0
        %1883 = vmatprep.subr.mxu0 0.0
        %1884 = vmatpush1.msra.mxu0 0.0
        %1885 = vmatprep.subr.mxu0 0.0
        %1886 = vmatpush1.msra.mxu0 0.0
        %1887 = vmatprep.subr.mxu0 0.0
        %1888 = vmatpush1.msra.mxu0 0.0
        %1889 = vmatprep.subr.mxu0 0.0
        %1890 = vmatpush1.msra.mxu0 0.0
        %1891 = vmatprep.subr.mxu0 0.0
        %1892 = vmatpush1.msra.mxu0 0.0
        %1893 = vmatprep.subr.mxu0 0.0
        %1894 = vmatpush1.msra.mxu0 0.0
        %1895 = vmatprep.subr.mxu0 0.0
        %1896 = vmatpush1.msra.mxu0 0.0
        %1897 = vmatprep.subr.mxu0 0.0
        %1898 = vmatpush1.msra.mxu0 0.0
        %1899 = vmatprep.subr.mxu0 0.0
        %1900 = vmatpush1.msra.mxu0 0.0
        %1901 = vmatprep.subr.mxu0 0.0
        %1902 = vmatpush1.msra.mxu0 0.0
        %1903 = vmatprep.subr.mxu0 0.0
        %1904 = vmatpush1.msra.mxu0 0.0
        %1905 = vmatprep.subr.mxu0 0.0
        %1906 = vmatpush1.msra.mxu0 0.0
        %1907 = vmatprep.subr.mxu0 0.0
        %1908 = vmatpush1.msra.mxu0 0.0
        %1909 = vmatprep.subr.mxu0 0.0
        %1910 = vmatpush1.msra.mxu0 0.0
        %1911 = vmatprep.subr.mxu0 0.0
        %1912 = vmatpush1.msra.mxu0 0.0
        %1913 = vmatprep.subr.mxu0 0.0
        %1914 = vmatpush1.msra.mxu0 0.0
        %1915 = vmatprep.subr.mxu0 0.0
        %1916 = vmatpush1.msra.mxu0 0.0
        %1917 = vmatprep.mubr.f32.mxu0 0.0
        %1918 = vmatmul.mubr.f32.gmra.mrb[0].mxu0 %v1851
        %v1919 = vpop.f32.mrb[0].mxu0
        %v1920 = vadd.f32 %v1848, %v1919
        %v1921 = vpop.f32.mrb[0].mxu0
        %1922 = vdwg.mxu0
        %v1923 = vlaneseq
        %v1924 = vand.u32 %v1923, 127
        %vm1925 = vcmp.lt.s32.totalorder %v1924, 12
        %v1926 = vsel %vm1925, %v1920, -inf
        %1927 = vmax.xlane.f32.xlu0 %v1926
        %v1928 = vpop.xlane.xlu0 %1927
        %v1929 = vsub.f32 %v1920, %v1928
        %v1930 = vmul.f32 %v1929, 1.442695
        %v1931 = vpow.pop %v1930
        %v1932 = vsel %vm1925, %v1931, 0.0
        %1933 = vadd.xlane.f32.xlu0 %v1932
        %v1934 = vpop.xlane.xlu0 %1933
        %v1935 = vmax.f32 %v1934, 1e-10
        %v1936 = vrcp.pop %v1935
        %v1937 = vmul.f32 %v1932, %v1936
        %v1938 = vsel %vm1925, %v1937, %v1920
        %1939 = vst [vmem:[%s673] sm:$0xff] %v1938
        %s1940 = sand.u32 %s408, 1
        %s1941 = scalar_lea.sflag [#allocation4], %s1940
        %s1942 = sand.u32 %s408, 1
        %s1943 = smul.addr %s1942, 8
        %s1944 = scalar_lea.vmem [#allocation17], %s1943
        // Predicated region
        $region125: #{tpu_custom_call.1} parent=87 // pred_check
          %p1945 = pneg %p418
        $region126: #{tpu_custom_call.1} parent=87 // pred_check_branch
          %1947 = sbr.rel (%p1945) target = $region128
        $region127: #{tpu_custom_call.1} parent=87 // pred_region
          %s1949 = ssub.s32 128, 128
          %1950 = vsyncadd %s1941, %s1949
          %s1951 = smul.addr %s38, 128
          %s1952 = scalar_lea.hbm %s17, %s1951
          %s1954 = sshll.u32 %s1944, 4
          %s1955 = int_to_ptr.vmem [resolvable:$true] %s1954
          %1957 = dma.vmem_to_hbm [thread:$0]  %s1955, 128, %s1952, %s1941
        $region128: #{tpu_custom_call.1} parent=87 // pred_fallthru
          _
      $region88: #{tpu_custom_call.1} parent=5 // pred_fallthru
        _
      %p1958 = scmp.le.s32.totalorder 2, %s33
      // Predicated region
      $region129: #{tpu_custom_call.1} parent=5 // pred_check
        %p1959 = pneg %p1958
      $region130: #{tpu_custom_call.1} parent=5 // pred_check_branch
        %1961 = sbr.rel (%p1959) target = $region132
      $region131: #{tpu_custom_call.1} parent=5 // pred_region
        %s1962 = ssub.s32 %s33, 2
        // Predicated region
        $region133: #{tpu_custom_call.1} parent=131 // pred_check
          %p1963 = pneg %p424
        $region134: #{tpu_custom_call.1} parent=131 // pred_check_branch
          %1965 = sbr.rel (%p1963) target = $region136
        $region135: #{tpu_custom_call.1} parent=131 // pred_region
          %s1966 = sand.u32 %s409, 1
          %s1967 = scalar_lea.sflag [#allocation4], %s1966
          %s1968 = sand.u32 %s409, 1
          %s1969 = smul.addr %s1968, 8
          %s1970 = scalar_lea.vmem [#allocation17], %s1969
          %1971 = dma.done %s1967, 128
        $region136: #{tpu_custom_call.1} parent=131 // pred_fallthru
          _
      $region132: #{tpu_custom_call.1} parent=5 // pred_fallthru
        _
    $region6: #{tpu_custom_call.1} parent=1 // loop_footer
      %s37 = sadd.s32 1, %s33
    $region7: #{tpu_custom_call.1} parent=1 // loop_footer_branch
      %32 = sbr.rel target = $region3
    $region8: #{tpu_custom_call.1} parent=1 // loop_exit
      _
    %1972 = vsyncpa [#allocation3], 1
    %s1973 = scalar_lea.sflag [#allocation3], 1
    %1974 = vsyncpa %s1973, 1
    %1975 = vsyncpa [#allocation6], 1
    %1976 = vsyncpa [#allocation9], 1
    %1977 = vsyncpa [#allocation12], 1
    %1978 = vsyncpa [#allocation15], 1
    %1979 = vsyncpa [#allocation4], 1
    %s1980 = scalar_lea.sflag [#allocation4], 1
    %1981 = vsyncpa %s1980, 1

</llo_original>
